<compile_context>
chip_gen: v7x
topology: tpu7x:2x2x1
jax: 0.10.0
libtpu: 0.0.40
codegen_flags: <defaults>
</compile_context>

<pallas_src>
import functools

import jax
import jax.numpy as jnp
from jax.experimental import pallas as pl
from jax.experimental.pallas import tpu as pltpu

IN_FEATURES = 4005
HIDDEN = 128
OUT_FEATURES = 64
BN_EPS = 1e-5


# ----------------------------------------------------------------------------
# Pallas kernel: one batch tile of the fully collapsed affine map.
# ----------------------------------------------------------------------------
def fused_affine_kernel(x_ref, w_ref, b_ref, o_ref):
    # x_ref: (TB, 4005) f32/bf16   w_ref: (4005, 64) bf16 (VMEM-resident)
    # b_ref: (1, 64) f32           o_ref: (TB, 64) f32
    x16 = x_ref[...].astype(jnp.bfloat16)          # no-op if x already bf16
    acc = jnp.dot(x16, w_ref[...], preferred_element_type=jnp.float32)
    o_ref[...] = acc + b_ref[...]


def _round_up(n, m):
    return ((n + m - 1) // m) * m


@functools.partial(jax.jit, static_argnames=("block_b",))
def resnet2_forward(x, w_folded, b_folded, *, block_b=1024):
    """x: (B, 4005) f32 (or bf16) -> (B, 64) f32."""
    x = x.reshape(x.shape[0], -1)                  # nn.Flatten()
    B = x.shape[0]

    # Batch tile: sublane-aligned, <= block_b, and split so the "parallel"
    # batch axis has >= 2 grid steps whenever B > 8 (v7x megacore).
    tb = max(8, min(_round_up(block_b, 8), _round_up(pl.cdiv(B, 2), 8)))
    grid_b = pl.cdiv(B, tb)                        # ragged last block is masked by Pallas

    x_itemsize = jnp.dtype(x.dtype).itemsize
    w_bytes = IN_FEATURES * OUT_FEATURES * 2       # bf16 weight
    # Double-buffered x/out tiles + resident weight/bias (+ margin).
    vmem_limit = int(
        2 * tb * IN_FEATURES * x_itemsize
        + 2 * tb * OUT_FEATURES * 4
        + 2 * (w_bytes + OUT_FEATURES * 4)
        + (4 << 20)
    )
    vmem_limit = max(vmem_limit, 32 << 20)         # never below the default scoped limit

    cost = pl.CostEstimate(
        flops=2 * B * IN_FEATURES * OUT_FEATURES,
        transcendentals=0,
        bytes_accessed=B * IN_FEATURES * x_itemsize
        + w_bytes
        + OUT_FEATURES * 4
        + B * OUT_FEATURES * 4,
    )

    return pl.pallas_call(
        fused_affine_kernel,
        out_shape=jax.ShapeDtypeStruct((B, OUT_FEATURES), jnp.float32),
        grid_spec=pltpu.PrefetchScalarGridSpec(
            num_scalar_prefetch=0,
            grid=(grid_b,),
            in_specs=[
                # x: tiled along batch (last dim = full 4005, so no (8,128) issue)
                pl.BlockSpec((tb, IN_FEATURES), lambda i: (i, 0)),
                # folded weight: constant block index -> stays resident in VMEM
                pl.BlockSpec((IN_FEATURES, OUT_FEATURES), lambda i: (0, 0)),
                # folded bias
                pl.BlockSpec((1, OUT_FEATURES), lambda i: (0, 0)),
            ],
            out_specs=pl.BlockSpec((tb, OUT_FEATURES), lambda i: (i, 0)),
        ),
        compiler_params=pltpu.CompilerParams(
            dimension_semantics=("parallel",),     # megacore sharding on v7x
            vmem_limit_bytes=vmem_limit,
        ),
        cost_estimate=cost,
    )(x, w_folded, b_folded)


# ----------------------------------------------------------------------------
# Parameter construction (PyTorch-default-like init) and offline folding.
# ----------------------------------------------------------------------------
def make_params(key):
    ks = jax.random.split(key, 16)

    def lin(kw, kb, fan_in, fan_out):
        bound = 1.0 / jnp.sqrt(jnp.float32(fan_in))
        w = jax.random.uniform(kw, (fan_in, fan_out), jnp.float32, -bound, bound)
        b = jax.random.uniform(kb, (1, fan_out), jnp.float32, -bound, bound)
        return w, b

    w_in, b_in = lin(ks[0], ks[1], IN_FEATURES, HIDDEN)

    res_w, res_b = [], []
    for i in range(9):  # res1..res3, 3 linears each (res4/res5 unused by forward)
        w, b = lin(jax.random.fold_in(ks[2], i), jax.random.fold_in(ks[3], i), HIDDEN, HIDDEN)
        res_w.append(w)
        res_b.append(b)
    w_res = jnp.stack(res_w, axis=0)               # (9, 128, 128)
    b_res = jnp.stack(res_b, axis=0)               # (9, 1, 128)

    w_out, b_out = lin(ks[4], ks[5], HIDDEN, OUT_FEATURES)

    def bn_fold(kg, kb, n):
        gamma = 1.0 + 0.1 * jax.random.normal(kg, (1, n), jnp.float32)
        beta = 0.1 * jax.random.normal(kb, (1, n), jnp.float32)
        running_mean = jnp.zeros((1, n), jnp.float32)
        running_var = jnp.ones((1, n), jnp.float32)
        scale = gamma / jnp.sqrt(running_var + BN_EPS)
        shift = beta - running_mean * scale
        return scale, shift

    bn_in_s, bn_in_b = bn_fold(ks[6], ks[7], HIDDEN)
    bn_out_s, bn_out_b = bn_fold(ks[8], ks[9], OUT_FEATURES)

    return dict(
        w_in=w_in, b_in=b_in, bn_in_s=bn_in_s, bn_in_b=bn_in_b,
        w_res=w_res, b_res=b_res,
        w_out=w_out, b_out=b_out, bn_out_s=bn_out_s, bn_out_b=bn_out_b,
    )


def fold_params(p):
    """Collapse the whole (affine, eval-mode) forward into (W_total, b_total)."""
    with jax.default_matmul_precision("highest"):   # scoped, not a global config mutation
        # net_in: Linear + BN folded:  x1 = x @ A_in + c_in
        A_in = p["w_in"] * p["bn_in_s"]                       # (4005, 128)
        c_in = p["b_in"] * p["bn_in_s"] + p["bn_in_b"]        # (1, 128)

        def fold_block(base):
            w1, w2, w3 = p["w_res"][base], p["w_res"][base + 1], p["w_res"][base + 2]
            b1, b2, b3 = p["b_res"][base], p["b_res"][base + 1], p["b_res"][base + 2]
            M = w1 @ w2 @ w3                                  # (128, 128)
            v = (b1 @ w2 + b2) @ w3 + b3                      # (1, 128)
            return M, v

        M1, v1 = fold_block(0)   # res1
        M2, v2 = fold_block(3)   # res2
        M3, v3 = fold_block(6)   # res3

        I = jnp.eye(HIDDEN, dtype=jnp.float32)
        # x2 = x1 M1 + v1 ; x3 = x1 P3 + q3 ; x4 = x1 P4 + q4 ; x34 = x3 + x4
        P3 = (I + M1) @ M2
        q3 = v1 @ M2 + v2
        P4 = (M1 + P3) @ M3
        q4 = (v1 + q3) @ M3 + v3
        S = P3 + P4              # (128, 128)
        qs = q3 + q4             # (1, 128)

        # net_out: Linear + BN folded
        A_out = p["w_out"] * p["bn_out_s"]                    # (128, 64)
        c_out = p["b_out"] * p["bn_out_s"] + p["bn_out_b"]    # (1, 64)

        T = S @ A_out                                         # (128, 64)
        W_total = A_in @ T                                    # (4005, 64)
        b_total = c_in @ T + qs @ A_out + c_out               # (1, 64)

    # Weight narrowed to bf16 (halves resident-weight HBM bytes); bias stays f32.
    return W_total.astype(jnp.bfloat16), b_total.astype(jnp.float32)


# ----------------------------------------------------------------------------
# Pure-JAX references.
# ----------------------------------------------------------------------------
def reference_forward(x, p):
    """Structured reference matching the original module (eval mode), f32-highest."""
    with jax.default_matmul_precision("highest"):
        x1 = (x @ p["w_in"] + p["b_in"]) * p["bn_in_s"] + p["bn_in_b"]

        def block(h, base):
            for j in range(3):
                h = h @ p["w_res"][base + j] + p["b_res"][base + j]
            return h

        x2 = block(x1, 0)
        x3 = block(x1 + x2, 3)
        x4 = block(x2 + x3, 6)
        x34 = x4 + x3
        return (x34 @ p["w_out"] + p["b_out"]) * p["bn_out_s"] + p["bn_out_b"]


def reference_folded(x, w_folded, b_folded):
    """Same math / precision as the kernel: bf16 operands, f32 accumulation."""
    return jnp.dot(x.astype(jnp.bfloat16), w_folded,
                   preferred_element_type=jnp.float32) + b_folded


# ----------------------------------------------------------------------------
if __name__ == "__main__":
    key = jax.random.PRNGKey(0)
    k_x, k_p = jax.random.split(key)

    params = make_params(k_p)
    w_folded, b_folded = fold_params(params)

    # Small batch (single grid step).
    B = 8
    x = jax.random.normal(k_x, (B, IN_FEATURES), jnp.float32)
    out = jax.block_until_ready(resnet2_forward(x, w_folded, b_folded))
    assert out.shape == (B, OUT_FEATURES)

    ref_fold = reference_folded(x, w_folded, b_folded)
    ref_full = reference_forward(x, params)
    # Tight check vs the exact bf16/f32-accumulate math the kernel implements.
    assert jnp.allclose(out, ref_fold, atol=1e-3, rtol=1e-3), "mismatch vs folded reference"
    # Looser check vs the original structured f32 module (fold reassociation +
    # bf16 weight/activation rounding only).
    assert jnp.allclose(out, ref_full, atol=3e-2, rtol=3e-2), "mismatch vs structured reference"

    # Exercise a multi-step grid with a ragged final batch block (no padding pass).
    B2 = 200
    x2 = jax.random.normal(jax.random.fold_in(k_x, 1), (B2, IN_FEATURES), jnp.float32)
    out2 = jax.block_until_ready(resnet2_forward(x2, w_folded, b_folded, block_b=128))
    assert out2.shape == (B2, OUT_FEATURES)
    ref2 = reference_folded(x2, w_folded, b_folded)
    assert jnp.allclose(out2, ref2, atol=1e-3, rtol=1e-3), "mismatch on gridded batch"

    # Batch not a multiple of the sublane tile (8): ragged last block masking.
    B3 = 13
    x3 = jax.random.normal(jax.random.fold_in(k_x, 2), (B3, IN_FEATURES), jnp.float32)
    out3 = jax.block_until_ready(resnet2_forward(x3, w_folded, b_folded))
    assert out3.shape == (B3, OUT_FEATURES)
    ref3 = reference_folded(x3, w_folded, b_folded)
    assert jnp.allclose(out3, ref3, atol=1e-3, rtol=1e-3), "mismatch on ragged batch"

    print("KERNEL_OK")
</pallas_src>

<mosaic_0001>
module attributes {stable_mosaic.version = 11 : i64} {
  func.func @fused_affine_kernel(%arg0: i32, %arg1: memref<8x4005xf32, #tpu.memory_space<vmem>>, %arg2: memref<4005x64xbf16, #tpu.memory_space<vmem>>, %arg3: memref<1x64xf32, #tpu.memory_space<vmem>>, %arg4: memref<8x64xf32, #tpu.memory_space<vmem>>) attributes {dimension_semantics = [#tpu.dimension_semantics<parallel>], iteration_bounds = array<i64: 1>, scalar_prefetch = 0 : i64, scratch_operands = 0 : i64, tpu.core_type = #tpu.core_type<tc>, window_params = [{transform_indices = @transform_0, window_bounds = array<i64: 8, 4005>}, {pipeline_mode = #tpu.pipeline_mode<synchronous>, transform_indices = @transform_1, window_bounds = array<i64: 4005, 64>}, {pipeline_mode = #tpu.pipeline_mode<synchronous>, transform_indices = @transform_2, window_bounds = array<i64: 1, 64>}, {transform_indices = @transform_3, window_bounds = array<i64: 8, 64>}]} {
    %c0 = arith.constant 0 : index
    %c0_0 = arith.constant 0 : index
    %0 = vector.load %arg1[%c0, %c0_0] : memref<8x4005xf32, #tpu.memory_space<vmem>>, vector<8x4005xf32>
    %1 = arith.truncf %0 : vector<8x4005xf32> to vector<8x4005xbf16>
    %c0_1 = arith.constant 0 : index
    %c0_2 = arith.constant 0 : index
    %2 = vector.load %arg2[%c0_1, %c0_2] : memref<4005x64xbf16, #tpu.memory_space<vmem>>, vector<4005x64xbf16>
    %cst = arith.constant dense<0.000000e+00> : vector<8x64xf32>
    %3 = tpu.matmul %1, %2, %cst {dimension_numbers = #tpu.dot_dimension_numbers<[1], [0], [0], [1], [0, 0, 1, 1], [], []>} : vector<8x4005xbf16>, vector<4005x64xbf16>, vector<8x64xf32> -> vector<8x64xf32>
    %c0_3 = arith.constant 0 : index
    %c0_4 = arith.constant 0 : index
    %4 = vector.load %arg3[%c0_3, %c0_4] : memref<1x64xf32, #tpu.memory_space<vmem>>, vector<1x64xf32>
    %5 = vector.broadcast %4 : vector<1x64xf32> to vector<8x64xf32>
    %6 = arith.addf %3, %5 : vector<8x64xf32>
    %c0_5 = arith.constant 0 : index
    %c0_6 = arith.constant 0 : index
    %7 = vector.load %arg4[%c0_5, %c0_6] : memref<8x64xf32, #tpu.memory_space<vmem>>, vector<8x64xf32>
    tpu.vector_store %arg4[%c0_5, %c0_6], %6 {strides = array<i32>} : memref<8x64xf32, #tpu.memory_space<vmem>>, vector<8x64xf32>,
    return
  }
  func.func @transform_0(%arg0: i32) -> (i32, i32) {
    %c0_i32 = arith.constant 0 : i32
    %c0_i32_0 = arith.constant 0 : i32
    return %arg0, %c0_i32 : i32, i32
  }
  func.func @transform_1(%arg0: i32) -> (i32, i32) {
    %c0_i32 = arith.constant 0 : i32
    %c0_i32_0 = arith.constant 0 : i32
    %c0_i32_1 = arith.constant 0 : i32
    return %c0_i32, %c0_i32_0 : i32, i32
  }
  func.func @transform_2(%arg0: i32) -> (i32, i32) {
    %c0_i32 = arith.constant 0 : i32
    %c0_i32_0 = arith.constant 0 : i32
    %c0_i32_1 = arith.constant 0 : i32
    return %c0_i32, %c0_i32_0 : i32, i32
  }
  func.func @transform_3(%arg0: i32) -> (i32, i32) {
    %c0_i32 = arith.constant 0 : i32
    %c0_i32_0 = arith.constant 0 : i32
    return %arg0, %c0_i32 : i32, i32
  }
}

</mosaic_0001>

<llo_original>
// kernel: resnet2_forward.1
$region0: #{resnet2_forward.1}
  #allocation0 [shape = 'u32[]', space=smem, size = 0x4, offset = 0x4, fixed_abs, tag = 'smem constant byte address 0x4 - core index']
  #allocation1 [shape = 'u32[144,128]{1,0:T(1,128)}', space=vmem, size = 0x12000, scoped, tag = 'internal scratch']
  %s0 = inlined_call_operand.vmem [shape: f32[8,4005], index: 0, kind: input, shape index: {}]
  %s1 = inlined_call_operand.vmem [shape: bf16[4005,64], index: 1, kind: input, shape index: {}]
  %s2 = inlined_call_operand.vmem [shape: f32[1,64], index: 2, kind: input, shape index: {}]
  %s3 = inlined_call_operand.hbm [shape: f32[8,64], index: 3, kind: output, shape index: {}]
  %s4 = sld [smem:[#allocation0]]
  $region22: #{resnet2_forward.1} parent=0
    _
  %s6 = ssub.s32 1, %s4
  %s7 = scalar_select 0, %s6, %s4
  $region1: #{resnet2_forward.1} parent=0
    #allocation2 [shape = 'u8[4096]{0}', space=vmem, size = 0x1000, scoped, tag = 'output window, operand 0, single buffered']
    #allocation3 [shape = 's32[1]{0}', space=sflag, size = 0x4, scoped, tag = 'scoped memory for resnet2_forward.1']
    %8 = vsyncpa [#allocation3], 0
    // Predicated region
    $region2: #{resnet2_forward.1} parent=1 // pred_check
      _
    $region3: #{resnet2_forward.1} parent=1 // pred_check_branch
      %10 = sbr.rel (0) target = $region5
    $region4: #{resnet2_forward.1} parent=1 // pred_region
      _
    $region5: #{resnet2_forward.1} parent=1 // pred_fallthru
      _
    // Predicated region
    $region6: #{resnet2_forward.1} parent=1 // pred_check
      _
    $region7: #{resnet2_forward.1} parent=1 // pred_check_branch
      %12 = sbr.rel (0) target = $region9
    $region8: #{resnet2_forward.1} parent=1 // pred_region
      _
    $region9: #{resnet2_forward.1} parent=1 // pred_fallthru
      _
    // Predicated region
    $region10: #{resnet2_forward.1} parent=1 // pred_check
      _
    $region11: #{resnet2_forward.1} parent=1 // pred_check_branch
      %14 = sbr.rel (0) target = $region13
    $region12: #{resnet2_forward.1} parent=1 // pred_region
      _
    $region13: #{resnet2_forward.1} parent=1 // pred_fallthru
      _
    %v16 = vld [vmem:[%s0] sm:$0xff]
    %v17 = vld [vmem:[%s0 + $0x8] sm:$0xff]
    %v18 = vld [vmem:[%s0 + $0x10] sm:$0xff]
    %v19 = vld [vmem:[%s0 + $0x18] sm:$0xff]
    %v20 = vld [vmem:[%s0 + $0x20] sm:$0xff]
    %v21 = vld [vmem:[%s0 + $0x28] sm:$0xff]
    %v22 = vld [vmem:[%s0 + $0x30] sm:$0xff]
    %v23 = vld [vmem:[%s0 + $0x38] sm:$0xff]
    %v24 = vld [vmem:[%s0 + $0x40] sm:$0xff]
    %v25 = vld [vmem:[%s0 + $0x48] sm:$0xff]
    %v26 = vld [vmem:[%s0 + $0x50] sm:$0xff]
    %v27 = vld [vmem:[%s0 + $0x58] sm:$0xff]
    %v28 = vld [vmem:[%s0 + $0x60] sm:$0xff]
    %v29 = vld [vmem:[%s0 + $0x68] sm:$0xff]
    %v30 = vld [vmem:[%s0 + $0x70] sm:$0xff]
    %v31 = vld [vmem:[%s0 + $0x78] sm:$0xff]
    %v32 = vld [vmem:[%s0 + $0x80] sm:$0xff]
    %v33 = vld [vmem:[%s0 + $0x88] sm:$0xff]
    %v34 = vld [vmem:[%s0 + $0x90] sm:$0xff]
    %v35 = vld [vmem:[%s0 + $0x98] sm:$0xff]
    %v36 = vld [vmem:[%s0 + $0xa0] sm:$0xff]
    %v37 = vld [vmem:[%s0 + $0xa8] sm:$0xff]
    %v38 = vld [vmem:[%s0 + $0xb0] sm:$0xff]
    %v39 = vld [vmem:[%s0 + $0xb8] sm:$0xff]
    %v40 = vld [vmem:[%s0 + $0xc0] sm:$0xff]
    %v41 = vld [vmem:[%s0 + $0xc8] sm:$0xff]
    %v42 = vld [vmem:[%s0 + $0xd0] sm:$0xff]
    %v43 = vld [vmem:[%s0 + $0xd8] sm:$0xff]
    %v44 = vld [vmem:[%s0 + $0xe0] sm:$0xff]
    %v45 = vld [vmem:[%s0 + $0xe8] sm:$0xff]
    %v46 = vld [vmem:[%s0 + $0xf0] sm:$0xff]
    %v47 = vld [vmem:[%s0 + $0xf8] sm:$0xff]
    %v48 = vpack.c.bf16 %v16, %v16
    %v49 = vpack.c.bf16 %v17, %v17
    %v50 = vpack.c.bf16 %v18, %v18
    %v51 = vpack.c.bf16 %v19, %v19
    %v52 = vpack.c.bf16 %v20, %v20
    %v53 = vpack.c.bf16 %v21, %v21
    %v54 = vpack.c.bf16 %v22, %v22
    %v55 = vpack.c.bf16 %v23, %v23
    %v56 = vpack.c.bf16 %v24, %v24
    %v57 = vpack.c.bf16 %v25, %v25
    %v58 = vpack.c.bf16 %v26, %v26
    %v59 = vpack.c.bf16 %v27, %v27
    %v60 = vpack.c.bf16 %v28, %v28
    %v61 = vpack.c.bf16 %v29, %v29
    %v62 = vpack.c.bf16 %v30, %v30
    %v63 = vpack.c.bf16 %v31, %v31
    %v64 = vpack.c.bf16 %v32, %v32
    %v65 = vpack.c.bf16 %v33, %v33
    %v66 = vpack.c.bf16 %v34, %v34
    %v67 = vpack.c.bf16 %v35, %v35
    %v68 = vpack.c.bf16 %v36, %v36
    %v69 = vpack.c.bf16 %v37, %v37
    %v70 = vpack.c.bf16 %v38, %v38
    %v71 = vpack.c.bf16 %v39, %v39
    %v72 = vpack.c.bf16 %v40, %v40
    %v73 = vpack.c.bf16 %v41, %v41
    %v74 = vpack.c.bf16 %v42, %v42
    %v75 = vpack.c.bf16 %v43, %v43
    %v76 = vpack.c.bf16 %v44, %v44
    %v77 = vpack.c.bf16 %v45, %v45
    %v78 = vpack.c.bf16 %v46, %v46
    %v79 = vpack.c.bf16 %v47, %v47
    %v80 = vld [vmem:[%s1] sm:$0xf]
    %v81 = vld [vmem:[%s1 + $0x4] sm:$0xf]
    %v82 = vld [vmem:[%s1 + $0x8] sm:$0xf]
    %v83 = vld [vmem:[%s1 + $0xc] sm:$0xf]
    %v84 = vld [vmem:[%s1 + $0x10] sm:$0xf]
    %v85 = vld [vmem:[%s1 + $0x14] sm:$0xf]
    %v86 = vld [vmem:[%s1 + $0x18] sm:$0xf]
    %v87 = vld [vmem:[%s1 + $0x1c] sm:$0xf]
    %v88 = vld [vmem:[%s1 + $0x20] sm:$0xf]
    %v89 = vld [vmem:[%s1 + $0x24] sm:$0xf]
    %v90 = vld [vmem:[%s1 + $0x28] sm:$0xf]
    %v91 = vld [vmem:[%s1 + $0x2c] sm:$0xf]
    %v92 = vld [vmem:[%s1 + $0x30] sm:$0xf]
    %v93 = vld [vmem:[%s1 + $0x34] sm:$0xf]
    %v94 = vld [vmem:[%s1 + $0x38] sm:$0xf]
    %v95 = vld [vmem:[%s1 + $0x3c] sm:$0xf]
    %v96 = vld [vmem:[%s1 + $0x40] sm:$0xf]
    %v97 = vld [vmem:[%s1 + $0x44] sm:$0xf]
    %v98 = vld [vmem:[%s1 + $0x48] sm:$0xf]
    %v99 = vld [vmem:[%s1 + $0x4c] sm:$0xf]
    %v100 = vld [vmem:[%s1 + $0x50] sm:$0xf]
    %v101 = vld [vmem:[%s1 + $0x54] sm:$0xf]
    %v102 = vld [vmem:[%s1 + $0x58] sm:$0xf]
    %v103 = vld [vmem:[%s1 + $0x5c] sm:$0xf]
    %v104 = vld [vmem:[%s1 + $0x60] sm:$0xf]
    %v105 = vld [vmem:[%s1 + $0x64] sm:$0xf]
    %v106 = vld [vmem:[%s1 + $0x68] sm:$0xf]
    %v107 = vld [vmem:[%s1 + $0x6c] sm:$0xf]
    %v108 = vld [vmem:[%s1 + $0x70] sm:$0xf]
    %v109 = vld [vmem:[%s1 + $0x74] sm:$0xf]
    %v110 = vld [vmem:[%s1 + $0x78] sm:$0xf]
    %v111 = vld [vmem:[%s1 + $0x7c] sm:$0xf]
    %v112 = vld [vmem:[%s1 + $0x80] sm:$0xf]
    %v113 = vld [vmem:[%s1 + $0x84] sm:$0xf]
    %v114 = vld [vmem:[%s1 + $0x88] sm:$0xf]
    %v115 = vld [vmem:[%s1 + $0x8c] sm:$0xf]
    %v116 = vld [vmem:[%s1 + $0x90] sm:$0xf]
    %v117 = vld [vmem:[%s1 + $0x94] sm:$0xf]
    %v118 = vld [vmem:[%s1 + $0x98] sm:$0xf]
    %v119 = vld [vmem:[%s1 + $0x9c] sm:$0xf]
    %v120 = vld [vmem:[%s1 + $0xa0] sm:$0xf]
    %v121 = vld [vmem:[%s1 + $0xa4] sm:$0xf]
    %v122 = vld [vmem:[%s1 + $0xa8] sm:$0xf]
    %v123 = vld [vmem:[%s1 + $0xac] sm:$0xf]
    %v124 = vld [vmem:[%s1 + $0xb0] sm:$0xf]
    %v125 = vld [vmem:[%s1 + $0xb4] sm:$0xf]
    %v126 = vld [vmem:[%s1 + $0xb8] sm:$0xf]
    %v127 = vld [vmem:[%s1 + $0xbc] sm:$0xf]
    %v128 = vld [vmem:[%s1 + $0xc0] sm:$0xf]
    %v129 = vld [vmem:[%s1 + $0xc4] sm:$0xf]
    %v130 = vld [vmem:[%s1 + $0xc8] sm:$0xf]
    %v131 = vld [vmem:[%s1 + $0xcc] sm:$0xf]
    %v132 = vld [vmem:[%s1 + $0xd0] sm:$0xf]
    %v133 = vld [vmem:[%s1 + $0xd4] sm:$0xf]
    %v134 = vld [vmem:[%s1 + $0xd8] sm:$0xf]
    %v135 = vld [vmem:[%s1 + $0xdc] sm:$0xf]
    %v136 = vld [vmem:[%s1 + $0xe0] sm:$0xf]
    %v137 = vld [vmem:[%s1 + $0xe4] sm:$0xf]
    %v138 = vld [vmem:[%s1 + $0xe8] sm:$0xf]
    %v139 = vld [vmem:[%s1 + $0xec] sm:$0xf]
    %v140 = vld [vmem:[%s1 + $0xf0] sm:$0xf]
    %v141 = vld [vmem:[%s1 + $0xf4] sm:$0xf]
    %v142 = vld [vmem:[%s1 + $0xf8] sm:$0xf]
    %v143 = vld [vmem:[%s1 + $0xfc] sm:$0xf]
    %v144 = vld [vmem:[%s1 + $0x100] sm:$0xf]
    %v145 = vld [vmem:[%s1 + $0x104] sm:$0xf]
    %v146 = vld [vmem:[%s1 + $0x108] sm:$0xf]
    %v147 = vld [vmem:[%s1 + $0x10c] sm:$0xf]
    %v148 = vld [vmem:[%s1 + $0x110] sm:$0xf]
    %v149 = vld [vmem:[%s1 + $0x114] sm:$0xf]
    %v150 = vld [vmem:[%s1 + $0x118] sm:$0xf]
    %v151 = vld [vmem:[%s1 + $0x11c] sm:$0xf]
    %v152 = vld [vmem:[%s1 + $0x120] sm:$0xf]
    %v153 = vld [vmem:[%s1 + $0x124] sm:$0xf]
    %v154 = vld [vmem:[%s1 + $0x128] sm:$0xf]
    %v155 = vld [vmem:[%s1 + $0x12c] sm:$0xf]
    %v156 = vld [vmem:[%s1 + $0x130] sm:$0xf]
    %v157 = vld [vmem:[%s1 + $0x134] sm:$0xf]
    %v158 = vld [vmem:[%s1 + $0x138] sm:$0xf]
    %v159 = vld [vmem:[%s1 + $0x13c] sm:$0xf]
    %v160 = vld [vmem:[%s1 + $0x140] sm:$0xf]
    %v161 = vld [vmem:[%s1 + $0x144] sm:$0xf]
    %v162 = vld [vmem:[%s1 + $0x148] sm:$0xf]
    %v163 = vld [vmem:[%s1 + $0x14c] sm:$0xf]
    %v164 = vld [vmem:[%s1 + $0x150] sm:$0xf]
    %v165 = vld [vmem:[%s1 + $0x154] sm:$0xf]
    %v166 = vld [vmem:[%s1 + $0x158] sm:$0xf]
    %v167 = vld [vmem:[%s1 + $0x15c] sm:$0xf]
    %v168 = vld [vmem:[%s1 + $0x160] sm:$0xf]
    %v169 = vld [vmem:[%s1 + $0x164] sm:$0xf]
    %v170 = vld [vmem:[%s1 + $0x168] sm:$0xf]
    %v171 = vld [vmem:[%s1 + $0x16c] sm:$0xf]
    %v172 = vld [vmem:[%s1 + $0x170] sm:$0xf]
    %v173 = vld [vmem:[%s1 + $0x174] sm:$0xf]
    %v174 = vld [vmem:[%s1 + $0x178] sm:$0xf]
    %v175 = vld [vmem:[%s1 + $0x17c] sm:$0xf]
    %v176 = vld [vmem:[%s1 + $0x180] sm:$0xf]
    %v177 = vld [vmem:[%s1 + $0x184] sm:$0xf]
    %v178 = vld [vmem:[%s1 + $0x188] sm:$0xf]
    %v179 = vld [vmem:[%s1 + $0x18c] sm:$0xf]
    %v180 = vld [vmem:[%s1 + $0x190] sm:$0xf]
    %v181 = vld [vmem:[%s1 + $0x194] sm:$0xf]
    %v182 = vld [vmem:[%s1 + $0x198] sm:$0xf]
    %v183 = vld [vmem:[%s1 + $0x19c] sm:$0xf]
    %v184 = vld [vmem:[%s1 + $0x1a0] sm:$0xf]
    %v185 = vld [vmem:[%s1 + $0x1a4] sm:$0xf]
    %v186 = vld [vmem:[%s1 + $0x1a8] sm:$0xf]
    %v187 = vld [vmem:[%s1 + $0x1ac] sm:$0xf]
    %v188 = vld [vmem:[%s1 + $0x1b0] sm:$0xf]
    %v189 = vld [vmem:[%s1 + $0x1b4] sm:$0xf]
    %v190 = vld [vmem:[%s1 + $0x1b8] sm:$0xf]
    %v191 = vld [vmem:[%s1 + $0x1bc] sm:$0xf]
    %v192 = vld [vmem:[%s1 + $0x1c0] sm:$0xf]
    %v193 = vld [vmem:[%s1 + $0x1c4] sm:$0xf]
    %v194 = vld [vmem:[%s1 + $0x1c8] sm:$0xf]
    %v195 = vld [vmem:[%s1 + $0x1cc] sm:$0xf]
    %v196 = vld [vmem:[%s1 + $0x1d0] sm:$0xf]
    %v197 = vld [vmem:[%s1 + $0x1d4] sm:$0xf]
    %v198 = vld [vmem:[%s1 + $0x1d8] sm:$0xf]
    %v199 = vld [vmem:[%s1 + $0x1dc] sm:$0xf]
    %v200 = vld [vmem:[%s1 + $0x1e0] sm:$0xf]
    %v201 = vld [vmem:[%s1 + $0x1e4] sm:$0xf]
    %v202 = vld [vmem:[%s1 + $0x1e8] sm:$0xf]
    %v203 = vld [vmem:[%s1 + $0x1ec] sm:$0xf]
    %v204 = vld [vmem:[%s1 + $0x1f0] sm:$0xf]
    %v205 = vld [vmem:[%s1 + $0x1f4] sm:$0xf]
    %v206 = vld [vmem:[%s1 + $0x1f8] sm:$0xf]
    %v207 = vld [vmem:[%s1 + $0x1fc] sm:$0xf]
    %v208 = vld [vmem:[%s1 + $0x200] sm:$0xf]
    %v209 = vld [vmem:[%s1 + $0x204] sm:$0xf]
    %v210 = vld [vmem:[%s1 + $0x208] sm:$0xf]
    %v211 = vld [vmem:[%s1 + $0x20c] sm:$0xf]
    %v212 = vld [vmem:[%s1 + $0x210] sm:$0xf]
    %v213 = vld [vmem:[%s1 + $0x214] sm:$0xf]
    %v214 = vld [vmem:[%s1 + $0x218] sm:$0xf]
    %v215 = vld [vmem:[%s1 + $0x21c] sm:$0xf]
    %v216 = vld [vmem:[%s1 + $0x220] sm:$0xf]
    %v217 = vld [vmem:[%s1 + $0x224] sm:$0xf]
    %v218 = vld [vmem:[%s1 + $0x228] sm:$0xf]
    %v219 = vld [vmem:[%s1 + $0x22c] sm:$0xf]
    %v220 = vld [vmem:[%s1 + $0x230] sm:$0xf]
    %v221 = vld [vmem:[%s1 + $0x234] sm:$0xf]
    %v222 = vld [vmem:[%s1 + $0x238] sm:$0xf]
    %v223 = vld [vmem:[%s1 + $0x23c] sm:$0xf]
    %v224 = vld [vmem:[%s1 + $0x240] sm:$0xf]
    %v225 = vld [vmem:[%s1 + $0x244] sm:$0xf]
    %v226 = vld [vmem:[%s1 + $0x248] sm:$0xf]
    %v227 = vld [vmem:[%s1 + $0x24c] sm:$0xf]
    %v228 = vld [vmem:[%s1 + $0x250] sm:$0xf]
    %v229 = vld [vmem:[%s1 + $0x254] sm:$0xf]
    %v230 = vld [vmem:[%s1 + $0x258] sm:$0xf]
    %v231 = vld [vmem:[%s1 + $0x25c] sm:$0xf]
    %v232 = vld [vmem:[%s1 + $0x260] sm:$0xf]
    %v233 = vld [vmem:[%s1 + $0x264] sm:$0xf]
    %v234 = vld [vmem:[%s1 + $0x268] sm:$0xf]
    %v235 = vld [vmem:[%s1 + $0x26c] sm:$0xf]
    %v236 = vld [vmem:[%s1 + $0x270] sm:$0xf]
    %v237 = vld [vmem:[%s1 + $0x274] sm:$0xf]
    %v238 = vld [vmem:[%s1 + $0x278] sm:$0xf]
    %v239 = vld [vmem:[%s1 + $0x27c] sm:$0xf]
    %v240 = vld [vmem:[%s1 + $0x280] sm:$0xf]
    %v241 = vld [vmem:[%s1 + $0x284] sm:$0xf]
    %v242 = vld [vmem:[%s1 + $0x288] sm:$0xf]
    %v243 = vld [vmem:[%s1 + $0x28c] sm:$0xf]
    %v244 = vld [vmem:[%s1 + $0x290] sm:$0xf]
    %v245 = vld [vmem:[%s1 + $0x294] sm:$0xf]
    %v246 = vld [vmem:[%s1 + $0x298] sm:$0xf]
    %v247 = vld [vmem:[%s1 + $0x29c] sm:$0xf]
    %v248 = vld [vmem:[%s1 + $0x2a0] sm:$0xf]
    %v249 = vld [vmem:[%s1 + $0x2a4] sm:$0xf]
    %v250 = vld [vmem:[%s1 + $0x2a8] sm:$0xf]
    %v251 = vld [vmem:[%s1 + $0x2ac] sm:$0xf]
    %v252 = vld [vmem:[%s1 + $0x2b0] sm:$0xf]
    %v253 = vld [vmem:[%s1 + $0x2b4] sm:$0xf]
    %v254 = vld [vmem:[%s1 + $0x2b8] sm:$0xf]
    %v255 = vld [vmem:[%s1 + $0x2bc] sm:$0xf]
    %v256 = vld [vmem:[%s1 + $0x2c0] sm:$0xf]
    %v257 = vld [vmem:[%s1 + $0x2c4] sm:$0xf]
    %v258 = vld [vmem:[%s1 + $0x2c8] sm:$0xf]
    %v259 = vld [vmem:[%s1 + $0x2cc] sm:$0xf]
    %v260 = vld [vmem:[%s1 + $0x2d0] sm:$0xf]
    %v261 = vld [vmem:[%s1 + $0x2d4] sm:$0xf]
    %v262 = vld [vmem:[%s1 + $0x2d8] sm:$0xf]
    %v263 = vld [vmem:[%s1 + $0x2dc] sm:$0xf]
    %v264 = vld [vmem:[%s1 + $0x2e0] sm:$0xf]
    %v265 = vld [vmem:[%s1 + $0x2e4] sm:$0xf]
    %v266 = vld [vmem:[%s1 + $0x2e8] sm:$0xf]
    %v267 = vld [vmem:[%s1 + $0x2ec] sm:$0xf]
    %v268 = vld [vmem:[%s1 + $0x2f0] sm:$0xf]
    %v269 = vld [vmem:[%s1 + $0x2f4] sm:$0xf]
    %v270 = vld [vmem:[%s1 + $0x2f8] sm:$0xf]
    %v271 = vld [vmem:[%s1 + $0x2fc] sm:$0xf]
    %v272 = vld [vmem:[%s1 + $0x300] sm:$0xf]
    %v273 = vld [vmem:[%s1 + $0x304] sm:$0xf]
    %v274 = vld [vmem:[%s1 + $0x308] sm:$0xf]
    %v275 = vld [vmem:[%s1 + $0x30c] sm:$0xf]
    %v276 = vld [vmem:[%s1 + $0x310] sm:$0xf]
    %v277 = vld [vmem:[%s1 + $0x314] sm:$0xf]
    %v278 = vld [vmem:[%s1 + $0x318] sm:$0xf]
    %v279 = vld [vmem:[%s1 + $0x31c] sm:$0xf]
    %v280 = vld [vmem:[%s1 + $0x320] sm:$0xf]
    %v281 = vld [vmem:[%s1 + $0x324] sm:$0xf]
    %v282 = vld [vmem:[%s1 + $0x328] sm:$0xf]
    %v283 = vld [vmem:[%s1 + $0x32c] sm:$0xf]
    %v284 = vld [vmem:[%s1 + $0x330] sm:$0xf]
    %v285 = vld [vmem:[%s1 + $0x334] sm:$0xf]
    %v286 = vld [vmem:[%s1 + $0x338] sm:$0xf]
    %v287 = vld [vmem:[%s1 + $0x33c] sm:$0xf]
    %v288 = vld [vmem:[%s1 + $0x340] sm:$0xf]
    %v289 = vld [vmem:[%s1 + $0x344] sm:$0xf]
    %v290 = vld [vmem:[%s1 + $0x348] sm:$0xf]
    %v291 = vld [vmem:[%s1 + $0x34c] sm:$0xf]
    %v292 = vld [vmem:[%s1 + $0x350] sm:$0xf]
    %v293 = vld [vmem:[%s1 + $0x354] sm:$0xf]
    %v294 = vld [vmem:[%s1 + $0x358] sm:$0xf]
    %v295 = vld [vmem:[%s1 + $0x35c] sm:$0xf]
    %v296 = vld [vmem:[%s1 + $0x360] sm:$0xf]
    %v297 = vld [vmem:[%s1 + $0x364] sm:$0xf]
    %v298 = vld [vmem:[%s1 + $0x368] sm:$0xf]
    %v299 = vld [vmem:[%s1 + $0x36c] sm:$0xf]
    %v300 = vld [vmem:[%s1 + $0x370] sm:$0xf]
    %v301 = vld [vmem:[%s1 + $0x374] sm:$0xf]
    %v302 = vld [vmem:[%s1 + $0x378] sm:$0xf]
    %v303 = vld [vmem:[%s1 + $0x37c] sm:$0xf]
    %v304 = vld [vmem:[%s1 + $0x380] sm:$0xf]
    %v305 = vld [vmem:[%s1 + $0x384] sm:$0xf]
    %v306 = vld [vmem:[%s1 + $0x388] sm:$0xf]
    %v307 = vld [vmem:[%s1 + $0x38c] sm:$0xf]
    %v308 = vld [vmem:[%s1 + $0x390] sm:$0xf]
    %v309 = vld [vmem:[%s1 + $0x394] sm:$0xf]
    %v310 = vld [vmem:[%s1 + $0x398] sm:$0xf]
    %v311 = vld [vmem:[%s1 + $0x39c] sm:$0xf]
    %v312 = vld [vmem:[%s1 + $0x3a0] sm:$0xf]
    %v313 = vld [vmem:[%s1 + $0x3a4] sm:$0xf]
    %v314 = vld [vmem:[%s1 + $0x3a8] sm:$0xf]
    %v315 = vld [vmem:[%s1 + $0x3ac] sm:$0xf]
    %v316 = vld [vmem:[%s1 + $0x3b0] sm:$0xf]
    %v317 = vld [vmem:[%s1 + $0x3b4] sm:$0xf]
    %v318 = vld [vmem:[%s1 + $0x3b8] sm:$0xf]
    %v319 = vld [vmem:[%s1 + $0x3bc] sm:$0xf]
    %v320 = vld [vmem:[%s1 + $0x3c0] sm:$0xf]
    %v321 = vld [vmem:[%s1 + $0x3c4] sm:$0xf]
    %v322 = vld [vmem:[%s1 + $0x3c8] sm:$0xf]
    %v323 = vld [vmem:[%s1 + $0x3cc] sm:$0xf]
    %v324 = vld [vmem:[%s1 + $0x3d0] sm:$0xf]
    %v325 = vld [vmem:[%s1 + $0x3d4] sm:$0xf]
    %v326 = vld [vmem:[%s1 + $0x3d8] sm:$0xf]
    %v327 = vld [vmem:[%s1 + $0x3dc] sm:$0xf]
    %v328 = vld [vmem:[%s1 + $0x3e0] sm:$0xf]
    %v329 = vld [vmem:[%s1 + $0x3e4] sm:$0xf]
    %v330 = vld [vmem:[%s1 + $0x3e8] sm:$0xf]
    %v331 = vld [vmem:[%s1 + $0x3ec] sm:$0xf]
    %v332 = vld [vmem:[%s1 + $0x3f0] sm:$0xf]
    %v333 = vld [vmem:[%s1 + $0x3f4] sm:$0xf]
    %v334 = vld [vmem:[%s1 + $0x3f8] sm:$0xf]
    %v335 = vld [vmem:[%s1 + $0x3fc] sm:$0xf]
    %v336 = vld [vmem:[%s1 + $0x400] sm:$0xf]
    %v337 = vld [vmem:[%s1 + $0x404] sm:$0xf]
    %v338 = vld [vmem:[%s1 + $0x408] sm:$0xf]
    %v339 = vld [vmem:[%s1 + $0x40c] sm:$0xf]
    %v340 = vld [vmem:[%s1 + $0x410] sm:$0xf]
    %v341 = vld [vmem:[%s1 + $0x414] sm:$0xf]
    %v342 = vld [vmem:[%s1 + $0x418] sm:$0xf]
    %v343 = vld [vmem:[%s1 + $0x41c] sm:$0xf]
    %v344 = vld [vmem:[%s1 + $0x420] sm:$0xf]
    %v345 = vld [vmem:[%s1 + $0x424] sm:$0xf]
    %v346 = vld [vmem:[%s1 + $0x428] sm:$0xf]
    %v347 = vld [vmem:[%s1 + $0x42c] sm:$0xf]
    %v348 = vld [vmem:[%s1 + $0x430] sm:$0xf]
    %v349 = vld [vmem:[%s1 + $0x434] sm:$0xf]
    %v350 = vld [vmem:[%s1 + $0x438] sm:$0xf]
    %v351 = vld [vmem:[%s1 + $0x43c] sm:$0xf]
    %v352 = vld [vmem:[%s1 + $0x440] sm:$0xf]
    %v353 = vld [vmem:[%s1 + $0x444] sm:$0xf]
    %v354 = vld [vmem:[%s1 + $0x448] sm:$0xf]
    %v355 = vld [vmem:[%s1 + $0x44c] sm:$0xf]
    %v356 = vld [vmem:[%s1 + $0x450] sm:$0xf]
    %v357 = vld [vmem:[%s1 + $0x454] sm:$0xf]
    %v358 = vld [vmem:[%s1 + $0x458] sm:$0xf]
    %v359 = vld [vmem:[%s1 + $0x45c] sm:$0xf]
    %v360 = vld [vmem:[%s1 + $0x460] sm:$0xf]
    %v361 = vld [vmem:[%s1 + $0x464] sm:$0xf]
    %v362 = vld [vmem:[%s1 + $0x468] sm:$0xf]
    %v363 = vld [vmem:[%s1 + $0x46c] sm:$0xf]
    %v364 = vld [vmem:[%s1 + $0x470] sm:$0xf]
    %v365 = vld [vmem:[%s1 + $0x474] sm:$0xf]
    %v366 = vld [vmem:[%s1 + $0x478] sm:$0xf]
    %v367 = vld [vmem:[%s1 + $0x47c] sm:$0xf]
    %v368 = vld [vmem:[%s1 + $0x480] sm:$0xf]
    %v369 = vld [vmem:[%s1 + $0x484] sm:$0xf]
    %v370 = vld [vmem:[%s1 + $0x488] sm:$0xf]
    %v371 = vld [vmem:[%s1 + $0x48c] sm:$0xf]
    %v372 = vld [vmem:[%s1 + $0x490] sm:$0xf]
    %v373 = vld [vmem:[%s1 + $0x494] sm:$0xf]
    %v374 = vld [vmem:[%s1 + $0x498] sm:$0xf]
    %v375 = vld [vmem:[%s1 + $0x49c] sm:$0xf]
    %v376 = vld [vmem:[%s1 + $0x4a0] sm:$0xf]
    %v377 = vld [vmem:[%s1 + $0x4a4] sm:$0xf]
    %v378 = vld [vmem:[%s1 + $0x4a8] sm:$0xf]
    %v379 = vld [vmem:[%s1 + $0x4ac] sm:$0xf]
    %v380 = vld [vmem:[%s1 + $0x4b0] sm:$0xf]
    %v381 = vld [vmem:[%s1 + $0x4b4] sm:$0xf]
    %v382 = vld [vmem:[%s1 + $0x4b8] sm:$0xf]
    %v383 = vld [vmem:[%s1 + $0x4bc] sm:$0xf]
    %v384 = vld [vmem:[%s1 + $0x4c0] sm:$0xf]
    %v385 = vld [vmem:[%s1 + $0x4c4] sm:$0xf]
    %v386 = vld [vmem:[%s1 + $0x4c8] sm:$0xf]
    %v387 = vld [vmem:[%s1 + $0x4cc] sm:$0xf]
    %v388 = vld [vmem:[%s1 + $0x4d0] sm:$0xf]
    %v389 = vld [vmem:[%s1 + $0x4d4] sm:$0xf]
    %v390 = vld [vmem:[%s1 + $0x4d8] sm:$0xf]
    %v391 = vld [vmem:[%s1 + $0x4dc] sm:$0xf]
    %v392 = vld [vmem:[%s1 + $0x4e0] sm:$0xf]
    %v393 = vld [vmem:[%s1 + $0x4e4] sm:$0xf]
    %v394 = vld [vmem:[%s1 + $0x4e8] sm:$0xf]
    %v395 = vld [vmem:[%s1 + $0x4ec] sm:$0xf]
    %v396 = vld [vmem:[%s1 + $0x4f0] sm:$0xf]
    %v397 = vld [vmem:[%s1 + $0x4f4] sm:$0xf]
    %v398 = vld [vmem:[%s1 + $0x4f8] sm:$0xf]
    %v399 = vld [vmem:[%s1 + $0x4fc] sm:$0xf]
    %v400 = vld [vmem:[%s1 + $0x500] sm:$0xf]
    %v401 = vld [vmem:[%s1 + $0x504] sm:$0xf]
    %v402 = vld [vmem:[%s1 + $0x508] sm:$0xf]
    %v403 = vld [vmem:[%s1 + $0x50c] sm:$0xf]
    %v404 = vld [vmem:[%s1 + $0x510] sm:$0xf]
    %v405 = vld [vmem:[%s1 + $0x514] sm:$0xf]
    %v406 = vld [vmem:[%s1 + $0x518] sm:$0xf]
    %v407 = vld [vmem:[%s1 + $0x51c] sm:$0xf]
    %v408 = vld [vmem:[%s1 + $0x520] sm:$0xf]
    %v409 = vld [vmem:[%s1 + $0x524] sm:$0xf]
    %v410 = vld [vmem:[%s1 + $0x528] sm:$0xf]
    %v411 = vld [vmem:[%s1 + $0x52c] sm:$0xf]
    %v412 = vld [vmem:[%s1 + $0x530] sm:$0xf]
    %v413 = vld [vmem:[%s1 + $0x534] sm:$0xf]
    %v414 = vld [vmem:[%s1 + $0x538] sm:$0xf]
    %v415 = vld [vmem:[%s1 + $0x53c] sm:$0xf]
    %v416 = vld [vmem:[%s1 + $0x540] sm:$0xf]
    %v417 = vld [vmem:[%s1 + $0x544] sm:$0xf]
    %v418 = vld [vmem:[%s1 + $0x548] sm:$0xf]
    %v419 = vld [vmem:[%s1 + $0x54c] sm:$0xf]
    %v420 = vld [vmem:[%s1 + $0x550] sm:$0xf]
    %v421 = vld [vmem:[%s1 + $0x554] sm:$0xf]
    %v422 = vld [vmem:[%s1 + $0x558] sm:$0xf]
    %v423 = vld [vmem:[%s1 + $0x55c] sm:$0xf]
    %v424 = vld [vmem:[%s1 + $0x560] sm:$0xf]
    %v425 = vld [vmem:[%s1 + $0x564] sm:$0xf]
    %v426 = vld [vmem:[%s1 + $0x568] sm:$0xf]
    %v427 = vld [vmem:[%s1 + $0x56c] sm:$0xf]
    %v428 = vld [vmem:[%s1 + $0x570] sm:$0xf]
    %v429 = vld [vmem:[%s1 + $0x574] sm:$0xf]
    %v430 = vld [vmem:[%s1 + $0x578] sm:$0xf]
    %v431 = vld [vmem:[%s1 + $0x57c] sm:$0xf]
    %v432 = vld [vmem:[%s1 + $0x580] sm:$0xf]
    %v433 = vld [vmem:[%s1 + $0x584] sm:$0xf]
    %v434 = vld [vmem:[%s1 + $0x588] sm:$0xf]
    %v435 = vld [vmem:[%s1 + $0x58c] sm:$0xf]
    %v436 = vld [vmem:[%s1 + $0x590] sm:$0xf]
    %v437 = vld [vmem:[%s1 + $0x594] sm:$0xf]
    %v438 = vld [vmem:[%s1 + $0x598] sm:$0xf]
    %v439 = vld [vmem:[%s1 + $0x59c] sm:$0xf]
    %v440 = vld [vmem:[%s1 + $0x5a0] sm:$0xf]
    %v441 = vld [vmem:[%s1 + $0x5a4] sm:$0xf]
    %v442 = vld [vmem:[%s1 + $0x5a8] sm:$0xf]
    %v443 = vld [vmem:[%s1 + $0x5ac] sm:$0xf]
    %v444 = vld [vmem:[%s1 + $0x5b0] sm:$0xf]
    %v445 = vld [vmem:[%s1 + $0x5b4] sm:$0xf]
    %v446 = vld [vmem:[%s1 + $0x5b8] sm:$0xf]
    %v447 = vld [vmem:[%s1 + $0x5bc] sm:$0xf]
    %v448 = vld [vmem:[%s1 + $0x5c0] sm:$0xf]
    %v449 = vld [vmem:[%s1 + $0x5c4] sm:$0xf]
    %v450 = vld [vmem:[%s1 + $0x5c8] sm:$0xf]
    %v451 = vld [vmem:[%s1 + $0x5cc] sm:$0xf]
    %v452 = vld [vmem:[%s1 + $0x5d0] sm:$0xf]
    %v453 = vld [vmem:[%s1 + $0x5d4] sm:$0xf]
    %v454 = vld [vmem:[%s1 + $0x5d8] sm:$0xf]
    %v455 = vld [vmem:[%s1 + $0x5dc] sm:$0xf]
    %v456 = vld [vmem:[%s1 + $0x5e0] sm:$0xf]
    %v457 = vld [vmem:[%s1 + $0x5e4] sm:$0xf]
    %v458 = vld [vmem:[%s1 + $0x5e8] sm:$0xf]
    %v459 = vld [vmem:[%s1 + $0x5ec] sm:$0xf]
    %v460 = vld [vmem:[%s1 + $0x5f0] sm:$0xf]
    %v461 = vld [vmem:[%s1 + $0x5f4] sm:$0xf]
    %v462 = vld [vmem:[%s1 + $0x5f8] sm:$0xf]
    %v463 = vld [vmem:[%s1 + $0x5fc] sm:$0xf]
    %v464 = vld [vmem:[%s1 + $0x600] sm:$0xf]
    %v465 = vld [vmem:[%s1 + $0x604] sm:$0xf]
    %v466 = vld [vmem:[%s1 + $0x608] sm:$0xf]
    %v467 = vld [vmem:[%s1 + $0x60c] sm:$0xf]
    %v468 = vld [vmem:[%s1 + $0x610] sm:$0xf]
    %v469 = vld [vmem:[%s1 + $0x614] sm:$0xf]
    %v470 = vld [vmem:[%s1 + $0x618] sm:$0xf]
    %v471 = vld [vmem:[%s1 + $0x61c] sm:$0xf]
    %v472 = vld [vmem:[%s1 + $0x620] sm:$0xf]
    %v473 = vld [vmem:[%s1 + $0x624] sm:$0xf]
    %v474 = vld [vmem:[%s1 + $0x628] sm:$0xf]
    %v475 = vld [vmem:[%s1 + $0x62c] sm:$0xf]
    %v476 = vld [vmem:[%s1 + $0x630] sm:$0xf]
    %v477 = vld [vmem:[%s1 + $0x634] sm:$0xf]
    %v478 = vld [vmem:[%s1 + $0x638] sm:$0xf]
    %v479 = vld [vmem:[%s1 + $0x63c] sm:$0xf]
    %v480 = vld [vmem:[%s1 + $0x640] sm:$0xf]
    %v481 = vld [vmem:[%s1 + $0x644] sm:$0xf]
    %v482 = vld [vmem:[%s1 + $0x648] sm:$0xf]
    %v483 = vld [vmem:[%s1 + $0x64c] sm:$0xf]
    %v484 = vld [vmem:[%s1 + $0x650] sm:$0xf]
    %v485 = vld [vmem:[%s1 + $0x654] sm:$0xf]
    %v486 = vld [vmem:[%s1 + $0x658] sm:$0xf]
    %v487 = vld [vmem:[%s1 + $0x65c] sm:$0xf]
    %v488 = vld [vmem:[%s1 + $0x660] sm:$0xf]
    %v489 = vld [vmem:[%s1 + $0x664] sm:$0xf]
    %v490 = vld [vmem:[%s1 + $0x668] sm:$0xf]
    %v491 = vld [vmem:[%s1 + $0x66c] sm:$0xf]
    %v492 = vld [vmem:[%s1 + $0x670] sm:$0xf]
    %v493 = vld [vmem:[%s1 + $0x674] sm:$0xf]
    %v494 = vld [vmem:[%s1 + $0x678] sm:$0xf]
    %v495 = vld [vmem:[%s1 + $0x67c] sm:$0xf]
    %v496 = vld [vmem:[%s1 + $0x680] sm:$0xf]
    %v497 = vld [vmem:[%s1 + $0x684] sm:$0xf]
    %v498 = vld [vmem:[%s1 + $0x688] sm:$0xf]
    %v499 = vld [vmem:[%s1 + $0x68c] sm:$0xf]
    %v500 = vld [vmem:[%s1 + $0x690] sm:$0xf]
    %v501 = vld [vmem:[%s1 + $0x694] sm:$0xf]
    %v502 = vld [vmem:[%s1 + $0x698] sm:$0xf]
    %v503 = vld [vmem:[%s1 + $0x69c] sm:$0xf]
    %v504 = vld [vmem:[%s1 + $0x6a0] sm:$0xf]
    %v505 = vld [vmem:[%s1 + $0x6a4] sm:$0xf]
    %v506 = vld [vmem:[%s1 + $0x6a8] sm:$0xf]
    %v507 = vld [vmem:[%s1 + $0x6ac] sm:$0xf]
    %v508 = vld [vmem:[%s1 + $0x6b0] sm:$0xf]
    %v509 = vld [vmem:[%s1 + $0x6b4] sm:$0xf]
    %v510 = vld [vmem:[%s1 + $0x6b8] sm:$0xf]
    %v511 = vld [vmem:[%s1 + $0x6bc] sm:$0xf]
    %v512 = vld [vmem:[%s1 + $0x6c0] sm:$0xf]
    %v513 = vld [vmem:[%s1 + $0x6c4] sm:$0xf]
    %v514 = vld [vmem:[%s1 + $0x6c8] sm:$0xf]
    %v515 = vld [vmem:[%s1 + $0x6cc] sm:$0xf]
    %v516 = vld [vmem:[%s1 + $0x6d0] sm:$0xf]
    %v517 = vld [vmem:[%s1 + $0x6d4] sm:$0xf]
    %v518 = vld [vmem:[%s1 + $0x6d8] sm:$0xf]
    %v519 = vld [vmem:[%s1 + $0x6dc] sm:$0xf]
    %v520 = vld [vmem:[%s1 + $0x6e0] sm:$0xf]
    %v521 = vld [vmem:[%s1 + $0x6e4] sm:$0xf]
    %v522 = vld [vmem:[%s1 + $0x6e8] sm:$0xf]
    %v523 = vld [vmem:[%s1 + $0x6ec] sm:$0xf]
    %v524 = vld [vmem:[%s1 + $0x6f0] sm:$0xf]
    %v525 = vld [vmem:[%s1 + $0x6f4] sm:$0xf]
    %v526 = vld [vmem:[%s1 + $0x6f8] sm:$0xf]
    %v527 = vld [vmem:[%s1 + $0x6fc] sm:$0xf]
    %v528 = vld [vmem:[%s1 + $0x700] sm:$0xf]
    %v529 = vld [vmem:[%s1 + $0x704] sm:$0xf]
    %v530 = vld [vmem:[%s1 + $0x708] sm:$0xf]
    %v531 = vld [vmem:[%s1 + $0x70c] sm:$0xf]
    %v532 = vld [vmem:[%s1 + $0x710] sm:$0xf]
    %v533 = vld [vmem:[%s1 + $0x714] sm:$0xf]
    %v534 = vld [vmem:[%s1 + $0x718] sm:$0xf]
    %v535 = vld [vmem:[%s1 + $0x71c] sm:$0xf]
    %v536 = vld [vmem:[%s1 + $0x720] sm:$0xf]
    %v537 = vld [vmem:[%s1 + $0x724] sm:$0xf]
    %v538 = vld [vmem:[%s1 + $0x728] sm:$0xf]
    %v539 = vld [vmem:[%s1 + $0x72c] sm:$0xf]
    %v540 = vld [vmem:[%s1 + $0x730] sm:$0xf]
    %v541 = vld [vmem:[%s1 + $0x734] sm:$0xf]
    %v542 = vld [vmem:[%s1 + $0x738] sm:$0xf]
    %v543 = vld [vmem:[%s1 + $0x73c] sm:$0xf]
    %v544 = vld [vmem:[%s1 + $0x740] sm:$0xf]
    %v545 = vld [vmem:[%s1 + $0x744] sm:$0xf]
    %v546 = vld [vmem:[%s1 + $0x748] sm:$0xf]
    %v547 = vld [vmem:[%s1 + $0x74c] sm:$0xf]
    %v548 = vld [vmem:[%s1 + $0x750] sm:$0xf]
    %v549 = vld [vmem:[%s1 + $0x754] sm:$0xf]
    %v550 = vld [vmem:[%s1 + $0x758] sm:$0xf]
    %v551 = vld [vmem:[%s1 + $0x75c] sm:$0xf]
    %v552 = vld [vmem:[%s1 + $0x760] sm:$0xf]
    %v553 = vld [vmem:[%s1 + $0x764] sm:$0xf]
    %v554 = vld [vmem:[%s1 + $0x768] sm:$0xf]
    %v555 = vld [vmem:[%s1 + $0x76c] sm:$0xf]
    %v556 = vld [vmem:[%s1 + $0x770] sm:$0xf]
    %v557 = vld [vmem:[%s1 + $0x774] sm:$0xf]
    %v558 = vld [vmem:[%s1 + $0x778] sm:$0xf]
    %v559 = vld [vmem:[%s1 + $0x77c] sm:$0xf]
    %v560 = vld [vmem:[%s1 + $0x780] sm:$0xf]
    %v561 = vld [vmem:[%s1 + $0x784] sm:$0xf]
    %v562 = vld [vmem:[%s1 + $0x788] sm:$0xf]
    %v563 = vld [vmem:[%s1 + $0x78c] sm:$0xf]
    %v564 = vld [vmem:[%s1 + $0x790] sm:$0xf]
    %v565 = vld [vmem:[%s1 + $0x794] sm:$0xf]
    %v566 = vld [vmem:[%s1 + $0x798] sm:$0xf]
    %v567 = vld [vmem:[%s1 + $0x79c] sm:$0xf]
    %v568 = vld [vmem:[%s1 + $0x7a0] sm:$0xf]
    %v569 = vld [vmem:[%s1 + $0x7a4] sm:$0xf]
    %v570 = vld [vmem:[%s1 + $0x7a8] sm:$0xf]
    %v571 = vld [vmem:[%s1 + $0x7ac] sm:$0xf]
    %v572 = vld [vmem:[%s1 + $0x7b0] sm:$0xf]
    %v573 = vld [vmem:[%s1 + $0x7b4] sm:$0xf]
    %v574 = vld [vmem:[%s1 + $0x7b8] sm:$0xf]
    %v575 = vld [vmem:[%s1 + $0x7bc] sm:$0xf]
    %v576 = vld [vmem:[%s1 + $0x7c0] sm:$0xf]
    %v577 = vld [vmem:[%s1 + $0x7c4] sm:$0xf]
    %v578 = vld [vmem:[%s1 + $0x7c8] sm:$0xf]
    %v579 = vld [vmem:[%s1 + $0x7cc] sm:$0xf]
    %v580 = vld [vmem:[%s1 + $0x7d0] sm:$0x7]
    %v581 = vld [vmem:[%s2] sm:$0x1]
    %v583 = vlaneseq
    %v584 = vshrl.u32 %v583, 7
    %v585 = vsub.s32 0, %v584
    %v586 = vrot.slane %v581, %v585
    %v1089 = vunpack.c.l.b16 %v80
    %v1090 = vunpack.c.l.b16 %v81
    %v1091 = vunpack.c.l.b16 %v82
    %v1092 = vunpack.c.l.b16 %v83
    %v1093 = vunpack.c.l.b16 %v84
    %v1094 = vunpack.c.l.b16 %v85
    %v1095 = vunpack.c.l.b16 %v86
    %v1096 = vunpack.c.l.b16 %v87
    %v1097 = vunpack.c.l.b16 %v88
    %v1098 = vunpack.c.l.b16 %v89
    %v1099 = vunpack.c.l.b16 %v90
    %v1100 = vunpack.c.l.b16 %v91
    %v1101 = vunpack.c.l.b16 %v92
    %v1102 = vunpack.c.l.b16 %v93
    %v1103 = vunpack.c.l.b16 %v94
    %v1104 = vunpack.c.l.b16 %v95
    %v1105 = vunpack.c.l.b16 %v96
    %v1106 = vunpack.c.l.b16 %v97
    %v1107 = vunpack.c.l.b16 %v98
    %v1108 = vunpack.c.l.b16 %v99
    %v1109 = vunpack.c.l.b16 %v100
    %v1110 = vunpack.c.l.b16 %v101
    %v1111 = vunpack.c.l.b16 %v102
    %v1112 = vunpack.c.l.b16 %v103
    %v1113 = vunpack.c.l.b16 %v104
    %v1114 = vunpack.c.l.b16 %v105
    %v1115 = vunpack.c.l.b16 %v106
    %v1116 = vunpack.c.l.b16 %v107
    %v1117 = vunpack.c.l.b16 %v108
    %v1118 = vunpack.c.l.b16 %v109
    %v1119 = vunpack.c.l.b16 %v110
    %v1120 = vunpack.c.l.b16 %v111
    %v1121 = vunpack.c.l.b16 %v112
    %v1122 = vunpack.c.l.b16 %v113
    %v1123 = vunpack.c.l.b16 %v114
    %v1124 = vunpack.c.l.b16 %v115
    %v1125 = vunpack.c.l.b16 %v116
    %v1126 = vunpack.c.l.b16 %v117
    %v1127 = vunpack.c.l.b16 %v118
    %v1128 = vunpack.c.l.b16 %v119
    %v1129 = vunpack.c.l.b16 %v120
    %v1130 = vunpack.c.l.b16 %v121
    %v1131 = vunpack.c.l.b16 %v122
    %v1132 = vunpack.c.l.b16 %v123
    %v1133 = vunpack.c.l.b16 %v124
    %v1134 = vunpack.c.l.b16 %v125
    %v1135 = vunpack.c.l.b16 %v126
    %v1136 = vunpack.c.l.b16 %v127
    %v1137 = vunpack.c.l.b16 %v128
    %v1138 = vunpack.c.l.b16 %v129
    %v1139 = vunpack.c.l.b16 %v130
    %v1140 = vunpack.c.l.b16 %v131
    %v1141 = vunpack.c.l.b16 %v132
    %v1142 = vunpack.c.l.b16 %v133
    %v1143 = vunpack.c.l.b16 %v134
    %v1144 = vunpack.c.l.b16 %v135
    %v1145 = vunpack.c.l.b16 %v136
    %v1146 = vunpack.c.l.b16 %v137
    %v1147 = vunpack.c.l.b16 %v138
    %v1148 = vunpack.c.l.b16 %v139
    %v1149 = vunpack.c.l.b16 %v140
    %v1150 = vunpack.c.l.b16 %v141
    %v1151 = vunpack.c.l.b16 %v142
    %v1152 = vunpack.c.l.b16 %v143
    %v1153 = vunpack.c.l.b16 %v144
    %v1154 = vunpack.c.l.b16 %v145
    %v1155 = vunpack.c.l.b16 %v146
    %v1156 = vunpack.c.l.b16 %v147
    %v1157 = vunpack.c.l.b16 %v148
    %v1158 = vunpack.c.l.b16 %v149
    %v1159 = vunpack.c.l.b16 %v150
    %v1160 = vunpack.c.l.b16 %v151
    %v1161 = vunpack.c.l.b16 %v152
    %v1162 = vunpack.c.l.b16 %v153
    %v1163 = vunpack.c.l.b16 %v154
    %v1164 = vunpack.c.l.b16 %v155
    %v1165 = vunpack.c.l.b16 %v156
    %v1166 = vunpack.c.l.b16 %v157
    %v1167 = vunpack.c.l.b16 %v158
    %v1168 = vunpack.c.l.b16 %v159
    %v1169 = vunpack.c.l.b16 %v160
    %v1170 = vunpack.c.l.b16 %v161
    %v1171 = vunpack.c.l.b16 %v162
    %v1172 = vunpack.c.l.b16 %v163
    %v1173 = vunpack.c.l.b16 %v164
    %v1174 = vunpack.c.l.b16 %v165
    %v1175 = vunpack.c.l.b16 %v166
    %v1176 = vunpack.c.l.b16 %v167
    %v1177 = vunpack.c.l.b16 %v168
    %v1178 = vunpack.c.l.b16 %v169
    %v1179 = vunpack.c.l.b16 %v170
    %v1180 = vunpack.c.l.b16 %v171
    %v1181 = vunpack.c.l.b16 %v172
    %v1182 = vunpack.c.l.b16 %v173
    %v1183 = vunpack.c.l.b16 %v174
    %v1184 = vunpack.c.l.b16 %v175
    %v1185 = vunpack.c.l.b16 %v176
    %v1186 = vunpack.c.l.b16 %v177
    %v1187 = vunpack.c.l.b16 %v178
    %v1188 = vunpack.c.l.b16 %v179
    %v1189 = vunpack.c.l.b16 %v180
    %v1190 = vunpack.c.l.b16 %v181
    %v1191 = vunpack.c.l.b16 %v182
    %v1192 = vunpack.c.l.b16 %v183
    %v1193 = vunpack.c.l.b16 %v184
    %v1194 = vunpack.c.l.b16 %v185
    %v1195 = vunpack.c.l.b16 %v186
    %v1196 = vunpack.c.l.b16 %v187
    %v1197 = vunpack.c.l.b16 %v188
    %v1198 = vunpack.c.l.b16 %v189
    %v1199 = vunpack.c.l.b16 %v190
    %v1200 = vunpack.c.l.b16 %v191
    %v1201 = vunpack.c.l.b16 %v192
    %v1202 = vunpack.c.l.b16 %v193
    %v1203 = vunpack.c.l.b16 %v194
    %v1204 = vunpack.c.l.b16 %v195
    %v1205 = vunpack.c.l.b16 %v196
    %v1206 = vunpack.c.l.b16 %v197
    %v1207 = vunpack.c.l.b16 %v198
    %v1208 = vunpack.c.l.b16 %v199
    %v1209 = vunpack.c.l.b16 %v200
    %v1210 = vunpack.c.l.b16 %v201
    %v1211 = vunpack.c.l.b16 %v202
    %v1212 = vunpack.c.l.b16 %v203
    %v1213 = vunpack.c.l.b16 %v204
    %v1214 = vunpack.c.l.b16 %v205
    %v1215 = vunpack.c.l.b16 %v206
    %v1216 = vunpack.c.l.b16 %v207
    %v1217 = vunpack.c.l.b16 %v208
    %v1218 = vunpack.c.l.b16 %v209
    %v1219 = vunpack.c.l.b16 %v210
    %v1220 = vunpack.c.l.b16 %v211
    %v1221 = vunpack.c.l.b16 %v212
    %v1222 = vunpack.c.l.b16 %v213
    %v1223 = vunpack.c.l.b16 %v214
    %v1224 = vunpack.c.l.b16 %v215
    %v1225 = vunpack.c.l.b16 %v216
    %v1226 = vunpack.c.l.b16 %v217
    %v1227 = vunpack.c.l.b16 %v218
    %v1228 = vunpack.c.l.b16 %v219
    %v1229 = vunpack.c.l.b16 %v220
    %v1230 = vunpack.c.l.b16 %v221
    %v1231 = vunpack.c.l.b16 %v222
    %v1232 = vunpack.c.l.b16 %v223
    %v1233 = vunpack.c.l.b16 %v224
    %v1234 = vunpack.c.l.b16 %v225
    %v1235 = vunpack.c.l.b16 %v226
    %v1236 = vunpack.c.l.b16 %v227
    %v1237 = vunpack.c.l.b16 %v228
    %v1238 = vunpack.c.l.b16 %v229
    %v1239 = vunpack.c.l.b16 %v230
    %v1240 = vunpack.c.l.b16 %v231
    %v1241 = vunpack.c.l.b16 %v232
    %v1242 = vunpack.c.l.b16 %v233
    %v1243 = vunpack.c.l.b16 %v234
    %v1244 = vunpack.c.l.b16 %v235
    %v1245 = vunpack.c.l.b16 %v236
    %v1246 = vunpack.c.l.b16 %v237
    %v1247 = vunpack.c.l.b16 %v238
    %v1248 = vunpack.c.l.b16 %v239
    %v1249 = vunpack.c.l.b16 %v240
    %v1250 = vunpack.c.l.b16 %v241
    %v1251 = vunpack.c.l.b16 %v242
    %v1252 = vunpack.c.l.b16 %v243
    %v1253 = vunpack.c.l.b16 %v244
    %v1254 = vunpack.c.l.b16 %v245
    %v1255 = vunpack.c.l.b16 %v246
    %v1256 = vunpack.c.l.b16 %v247
    %v1257 = vunpack.c.l.b16 %v248
    %v1258 = vunpack.c.l.b16 %v249
    %v1259 = vunpack.c.l.b16 %v250
    %v1260 = vunpack.c.l.b16 %v251
    %v1261 = vunpack.c.l.b16 %v252
    %v1262 = vunpack.c.l.b16 %v253
    %v1263 = vunpack.c.l.b16 %v254
    %v1264 = vunpack.c.l.b16 %v255
    %v1265 = vunpack.c.l.b16 %v256
    %v1266 = vunpack.c.l.b16 %v257
    %v1267 = vunpack.c.l.b16 %v258
    %v1268 = vunpack.c.l.b16 %v259
    %v1269 = vunpack.c.l.b16 %v260
    %v1270 = vunpack.c.l.b16 %v261
    %v1271 = vunpack.c.l.b16 %v262
    %v1272 = vunpack.c.l.b16 %v263
    %v1273 = vunpack.c.l.b16 %v264
    %v1274 = vunpack.c.l.b16 %v265
    %v1275 = vunpack.c.l.b16 %v266
    %v1276 = vunpack.c.l.b16 %v267
    %v1277 = vunpack.c.l.b16 %v268
    %v1278 = vunpack.c.l.b16 %v269
    %v1279 = vunpack.c.l.b16 %v270
    %v1280 = vunpack.c.l.b16 %v271
    %v1281 = vunpack.c.l.b16 %v272
    %v1282 = vunpack.c.l.b16 %v273
    %v1283 = vunpack.c.l.b16 %v274
    %v1284 = vunpack.c.l.b16 %v275
    %v1285 = vunpack.c.l.b16 %v276
    %v1286 = vunpack.c.l.b16 %v277
    %v1287 = vunpack.c.l.b16 %v278
    %v1288 = vunpack.c.l.b16 %v279
    %v1289 = vunpack.c.l.b16 %v280
    %v1290 = vunpack.c.l.b16 %v281
    %v1291 = vunpack.c.l.b16 %v282
    %v1292 = vunpack.c.l.b16 %v283
    %v1293 = vunpack.c.l.b16 %v284
    %v1294 = vunpack.c.l.b16 %v285
    %v1295 = vunpack.c.l.b16 %v286
    %v1296 = vunpack.c.l.b16 %v287
    %v1297 = vunpack.c.l.b16 %v288
    %v1298 = vunpack.c.l.b16 %v289
    %v1299 = vunpack.c.l.b16 %v290
    %v1300 = vunpack.c.l.b16 %v291
    %v1301 = vunpack.c.l.b16 %v292
    %v1302 = vunpack.c.l.b16 %v293
    %v1303 = vunpack.c.l.b16 %v294
    %v1304 = vunpack.c.l.b16 %v295
    %v1305 = vunpack.c.l.b16 %v296
    %v1306 = vunpack.c.l.b16 %v297
    %v1307 = vunpack.c.l.b16 %v298
    %v1308 = vunpack.c.l.b16 %v299
    %v1309 = vunpack.c.l.b16 %v300
    %v1310 = vunpack.c.l.b16 %v301
    %v1311 = vunpack.c.l.b16 %v302
    %v1312 = vunpack.c.l.b16 %v303
    %v1313 = vunpack.c.l.b16 %v304
    %v1314 = vunpack.c.l.b16 %v305
    %v1315 = vunpack.c.l.b16 %v306
    %v1316 = vunpack.c.l.b16 %v307
    %v1317 = vunpack.c.l.b16 %v308
    %v1318 = vunpack.c.l.b16 %v309
    %v1319 = vunpack.c.l.b16 %v310
    %v1320 = vunpack.c.l.b16 %v311
    %v1321 = vunpack.c.l.b16 %v312
    %v1322 = vunpack.c.l.b16 %v313
    %v1323 = vunpack.c.l.b16 %v314
    %v1324 = vunpack.c.l.b16 %v315
    %v1325 = vunpack.c.l.b16 %v316
    %v1326 = vunpack.c.l.b16 %v317
    %v1327 = vunpack.c.l.b16 %v318
    %v1328 = vunpack.c.l.b16 %v319
    %v1329 = vunpack.c.l.b16 %v320
    %v1330 = vunpack.c.l.b16 %v321
    %v1331 = vunpack.c.l.b16 %v322
    %v1332 = vunpack.c.l.b16 %v323
    %v1333 = vunpack.c.l.b16 %v324
    %v1334 = vunpack.c.l.b16 %v325
    %v1335 = vunpack.c.l.b16 %v326
    %v1336 = vunpack.c.l.b16 %v327
    %v1337 = vunpack.c.l.b16 %v328
    %v1338 = vunpack.c.l.b16 %v329
    %v1339 = vunpack.c.l.b16 %v330
    %v1340 = vunpack.c.l.b16 %v331
    %v1341 = vunpack.c.l.b16 %v332
    %v1342 = vunpack.c.l.b16 %v333
    %v1343 = vunpack.c.l.b16 %v334
    %v1344 = vunpack.c.l.b16 %v335
    %v1345 = vunpack.c.l.b16 %v336
    %v1346 = vunpack.c.l.b16 %v337
    %v1347 = vunpack.c.l.b16 %v338
    %v1348 = vunpack.c.l.b16 %v339
    %v1349 = vunpack.c.l.b16 %v340
    %v1350 = vunpack.c.l.b16 %v341
    %v1351 = vunpack.c.l.b16 %v342
    %v1352 = vunpack.c.l.b16 %v343
    %v1353 = vunpack.c.l.b16 %v344
    %v1354 = vunpack.c.l.b16 %v345
    %v1355 = vunpack.c.l.b16 %v346
    %v1356 = vunpack.c.l.b16 %v347
    %v1357 = vunpack.c.l.b16 %v348
    %v1358 = vunpack.c.l.b16 %v349
    %v1359 = vunpack.c.l.b16 %v350
    %v1360 = vunpack.c.l.b16 %v351
    %v1361 = vunpack.c.l.b16 %v352
    %v1362 = vunpack.c.l.b16 %v353
    %v1363 = vunpack.c.l.b16 %v354
    %v1364 = vunpack.c.l.b16 %v355
    %v1365 = vunpack.c.l.b16 %v356
    %v1366 = vunpack.c.l.b16 %v357
    %v1367 = vunpack.c.l.b16 %v358
    %v1368 = vunpack.c.l.b16 %v359
    %v1369 = vunpack.c.l.b16 %v360
    %v1370 = vunpack.c.l.b16 %v361
    %v1371 = vunpack.c.l.b16 %v362
    %v1372 = vunpack.c.l.b16 %v363
    %v1373 = vunpack.c.l.b16 %v364
    %v1374 = vunpack.c.l.b16 %v365
    %v1375 = vunpack.c.l.b16 %v366
    %v1376 = vunpack.c.l.b16 %v367
    %v1377 = vunpack.c.l.b16 %v368
    %v1378 = vunpack.c.l.b16 %v369
    %v1379 = vunpack.c.l.b16 %v370
    %v1380 = vunpack.c.l.b16 %v371
    %v1381 = vunpack.c.l.b16 %v372
    %v1382 = vunpack.c.l.b16 %v373
    %v1383 = vunpack.c.l.b16 %v374
    %v1384 = vunpack.c.l.b16 %v375
    %v1385 = vunpack.c.l.b16 %v376
    %v1386 = vunpack.c.l.b16 %v377
    %v1387 = vunpack.c.l.b16 %v378
    %v1388 = vunpack.c.l.b16 %v379
    %v1389 = vunpack.c.l.b16 %v380
    %v1390 = vunpack.c.l.b16 %v381
    %v1391 = vunpack.c.l.b16 %v382
    %v1392 = vunpack.c.l.b16 %v383
    %v1393 = vunpack.c.l.b16 %v384
    %v1394 = vunpack.c.l.b16 %v385
    %v1395 = vunpack.c.l.b16 %v386
    %v1396 = vunpack.c.l.b16 %v387
    %v1397 = vunpack.c.l.b16 %v388
    %v1398 = vunpack.c.l.b16 %v389
    %v1399 = vunpack.c.l.b16 %v390
    %v1400 = vunpack.c.l.b16 %v391
    %v1401 = vunpack.c.l.b16 %v392
    %v1402 = vunpack.c.l.b16 %v393
    %v1403 = vunpack.c.l.b16 %v394
    %v1404 = vunpack.c.l.b16 %v395
    %v1405 = vunpack.c.l.b16 %v396
    %v1406 = vunpack.c.l.b16 %v397
    %v1407 = vunpack.c.l.b16 %v398
    %v1408 = vunpack.c.l.b16 %v399
    %v1409 = vunpack.c.l.b16 %v400
    %v1410 = vunpack.c.l.b16 %v401
    %v1411 = vunpack.c.l.b16 %v402
    %v1412 = vunpack.c.l.b16 %v403
    %v1413 = vunpack.c.l.b16 %v404
    %v1414 = vunpack.c.l.b16 %v405
    %v1415 = vunpack.c.l.b16 %v406
    %v1416 = vunpack.c.l.b16 %v407
    %v1417 = vunpack.c.l.b16 %v408
    %v1418 = vunpack.c.l.b16 %v409
    %v1419 = vunpack.c.l.b16 %v410
    %v1420 = vunpack.c.l.b16 %v411
    %v1421 = vunpack.c.l.b16 %v412
    %v1422 = vunpack.c.l.b16 %v413
    %v1423 = vunpack.c.l.b16 %v414
    %v1424 = vunpack.c.l.b16 %v415
    %v1425 = vunpack.c.l.b16 %v416
    %v1426 = vunpack.c.l.b16 %v417
    %v1427 = vunpack.c.l.b16 %v418
    %v1428 = vunpack.c.l.b16 %v419
    %v1429 = vunpack.c.l.b16 %v420
    %v1430 = vunpack.c.l.b16 %v421
    %v1431 = vunpack.c.l.b16 %v422
    %v1432 = vunpack.c.l.b16 %v423
    %v1433 = vunpack.c.l.b16 %v424
    %v1434 = vunpack.c.l.b16 %v425
    %v1435 = vunpack.c.l.b16 %v426
    %v1436 = vunpack.c.l.b16 %v427
    %v1437 = vunpack.c.l.b16 %v428
    %v1438 = vunpack.c.l.b16 %v429
    %v1439 = vunpack.c.l.b16 %v430
    %v1440 = vunpack.c.l.b16 %v431
    %v1441 = vunpack.c.l.b16 %v432
    %v1442 = vunpack.c.l.b16 %v433
    %v1443 = vunpack.c.l.b16 %v434
    %v1444 = vunpack.c.l.b16 %v435
    %v1445 = vunpack.c.l.b16 %v436
    %v1446 = vunpack.c.l.b16 %v437
    %v1447 = vunpack.c.l.b16 %v438
    %v1448 = vunpack.c.l.b16 %v439
    %v1449 = vunpack.c.l.b16 %v440
    %v1450 = vunpack.c.l.b16 %v441
    %v1451 = vunpack.c.l.b16 %v442
    %v1452 = vunpack.c.l.b16 %v443
    %v1453 = vunpack.c.l.b16 %v444
    %v1454 = vunpack.c.l.b16 %v445
    %v1455 = vunpack.c.l.b16 %v446
    %v1456 = vunpack.c.l.b16 %v447
    %v1457 = vunpack.c.l.b16 %v448
    %v1458 = vunpack.c.l.b16 %v449
    %v1459 = vunpack.c.l.b16 %v450
    %v1460 = vunpack.c.l.b16 %v451
    %v1461 = vunpack.c.l.b16 %v452
    %v1462 = vunpack.c.l.b16 %v453
    %v1463 = vunpack.c.l.b16 %v454
    %v1464 = vunpack.c.l.b16 %v455
    %v1465 = vunpack.c.l.b16 %v456
    %v1466 = vunpack.c.l.b16 %v457
    %v1467 = vunpack.c.l.b16 %v458
    %v1468 = vunpack.c.l.b16 %v459
    %v1469 = vunpack.c.l.b16 %v460
    %v1470 = vunpack.c.l.b16 %v461
    %v1471 = vunpack.c.l.b16 %v462
    %v1472 = vunpack.c.l.b16 %v463
    %v1473 = vunpack.c.l.b16 %v464
    %v1474 = vunpack.c.l.b16 %v465
    %v1475 = vunpack.c.l.b16 %v466
    %v1476 = vunpack.c.l.b16 %v467
    %v1477 = vunpack.c.l.b16 %v468
    %v1478 = vunpack.c.l.b16 %v469
    %v1479 = vunpack.c.l.b16 %v470
    %v1480 = vunpack.c.l.b16 %v471
    %v1481 = vunpack.c.l.b16 %v472
    %v1482 = vunpack.c.l.b16 %v473
    %v1483 = vunpack.c.l.b16 %v474
    %v1484 = vunpack.c.l.b16 %v475
    %v1485 = vunpack.c.l.b16 %v476
    %v1486 = vunpack.c.l.b16 %v477
    %v1487 = vunpack.c.l.b16 %v478
    %v1488 = vunpack.c.l.b16 %v479
    %v1489 = vunpack.c.l.b16 %v480
    %v1490 = vunpack.c.l.b16 %v481
    %v1491 = vunpack.c.l.b16 %v482
    %v1492 = vunpack.c.l.b16 %v483
    %v1493 = vunpack.c.l.b16 %v484
    %v1494 = vunpack.c.l.b16 %v485
    %v1495 = vunpack.c.l.b16 %v486
    %v1496 = vunpack.c.l.b16 %v487
    %v1497 = vunpack.c.l.b16 %v488
    %v1498 = vunpack.c.l.b16 %v489
    %v1499 = vunpack.c.l.b16 %v490
    %v1500 = vunpack.c.l.b16 %v491
    %v1501 = vunpack.c.l.b16 %v492
    %v1502 = vunpack.c.l.b16 %v493
    %v1503 = vunpack.c.l.b16 %v494
    %v1504 = vunpack.c.l.b16 %v495
    %v1505 = vunpack.c.l.b16 %v496
    %v1506 = vunpack.c.l.b16 %v497
    %v1507 = vunpack.c.l.b16 %v498
    %v1508 = vunpack.c.l.b16 %v499
    %v1509 = vunpack.c.l.b16 %v500
    %v1510 = vunpack.c.l.b16 %v501
    %v1511 = vunpack.c.l.b16 %v502
    %v1512 = vunpack.c.l.b16 %v503
    %v1513 = vunpack.c.l.b16 %v504
    %v1514 = vunpack.c.l.b16 %v505
    %v1515 = vunpack.c.l.b16 %v506
    %v1516 = vunpack.c.l.b16 %v507
    %v1517 = vunpack.c.l.b16 %v508
    %v1518 = vunpack.c.l.b16 %v509
    %v1519 = vunpack.c.l.b16 %v510
    %v1520 = vunpack.c.l.b16 %v511
    %v1521 = vunpack.c.l.b16 %v512
    %v1522 = vunpack.c.l.b16 %v513
    %v1523 = vunpack.c.l.b16 %v514
    %v1524 = vunpack.c.l.b16 %v515
    %v1525 = vunpack.c.l.b16 %v516
    %v1526 = vunpack.c.l.b16 %v517
    %v1527 = vunpack.c.l.b16 %v518
    %v1528 = vunpack.c.l.b16 %v519
    %v1529 = vunpack.c.l.b16 %v520
    %v1530 = vunpack.c.l.b16 %v521
    %v1531 = vunpack.c.l.b16 %v522
    %v1532 = vunpack.c.l.b16 %v523
    %v1533 = vunpack.c.l.b16 %v524
    %v1534 = vunpack.c.l.b16 %v525
    %v1535 = vunpack.c.l.b16 %v526
    %v1536 = vunpack.c.l.b16 %v527
    %v1537 = vunpack.c.l.b16 %v528
    %v1538 = vunpack.c.l.b16 %v529
    %v1539 = vunpack.c.l.b16 %v530
    %v1540 = vunpack.c.l.b16 %v531
    %v1541 = vunpack.c.l.b16 %v532
    %v1542 = vunpack.c.l.b16 %v533
    %v1543 = vunpack.c.l.b16 %v534
    %v1544 = vunpack.c.l.b16 %v535
    %v1545 = vunpack.c.l.b16 %v536
    %v1546 = vunpack.c.l.b16 %v537
    %v1547 = vunpack.c.l.b16 %v538
    %v1548 = vunpack.c.l.b16 %v539
    %v1549 = vunpack.c.l.b16 %v540
    %v1550 = vunpack.c.l.b16 %v541
    %v1551 = vunpack.c.l.b16 %v542
    %v1552 = vunpack.c.l.b16 %v543
    %v1553 = vunpack.c.l.b16 %v544
    %v1554 = vunpack.c.l.b16 %v545
    %v1555 = vunpack.c.l.b16 %v546
    %v1556 = vunpack.c.l.b16 %v547
    %v1557 = vunpack.c.l.b16 %v548
    %v1558 = vunpack.c.l.b16 %v549
    %v1559 = vunpack.c.l.b16 %v550
    %v1560 = vunpack.c.l.b16 %v551
    %v1561 = vunpack.c.l.b16 %v552
    %v1562 = vunpack.c.l.b16 %v553
    %v1563 = vunpack.c.l.b16 %v554
    %v1564 = vunpack.c.l.b16 %v555
    %v1565 = vunpack.c.l.b16 %v556
    %v1566 = vunpack.c.l.b16 %v557
    %v1567 = vunpack.c.l.b16 %v558
    %v1568 = vunpack.c.l.b16 %v559
    %v1569 = vunpack.c.l.b16 %v560
    %v1570 = vunpack.c.l.b16 %v561
    %v1571 = vunpack.c.l.b16 %v562
    %v1572 = vunpack.c.l.b16 %v563
    %v1573 = vunpack.c.l.b16 %v564
    %v1574 = vunpack.c.l.b16 %v565
    %v1575 = vunpack.c.l.b16 %v566
    %v1576 = vunpack.c.l.b16 %v567
    %v1577 = vunpack.c.l.b16 %v568
    %v1578 = vunpack.c.l.b16 %v569
    %v1579 = vunpack.c.l.b16 %v570
    %v1580 = vunpack.c.l.b16 %v571
    %v1581 = vunpack.c.l.b16 %v572
    %v1582 = vunpack.c.l.b16 %v573
    %v1583 = vunpack.c.l.b16 %v574
    %v1584 = vunpack.c.l.b16 %v575
    %v1585 = vunpack.c.l.b16 %v576
    %v1586 = vunpack.c.l.b16 %v577
    %v1587 = vunpack.c.l.b16 %v578
    %v1588 = vunpack.c.l.b16 %v579
    %v1589 = vunpack.c.l.b16 %v580
    %v1590 = vpack.c.b16 %v1090, %v1089
    %v1591 = vpack.c.b16 %v1092, %v1091
    %v1592 = vpack.c.b16 %v1094, %v1093
    %v1593 = vpack.c.b16 %v1096, %v1095
    %v1594 = vpack.c.b16 %v1098, %v1097
    %v1595 = vpack.c.b16 %v1100, %v1099
    %v1596 = vpack.c.b16 %v1102, %v1101
    %v1597 = vpack.c.b16 %v1104, %v1103
    %v1598 = vpack.c.b16 %v1106, %v1105
    %v1599 = vpack.c.b16 %v1108, %v1107
    %v1600 = vpack.c.b16 %v1110, %v1109
    %v1601 = vpack.c.b16 %v1112, %v1111
    %v1602 = vpack.c.b16 %v1114, %v1113
    %v1603 = vpack.c.b16 %v1116, %v1115
    %v1604 = vpack.c.b16 %v1118, %v1117
    %v1605 = vpack.c.b16 %v1120, %v1119
    %v1606 = vpack.c.b16 %v1122, %v1121
    %v1607 = vpack.c.b16 %v1124, %v1123
    %v1608 = vpack.c.b16 %v1126, %v1125
    %v1609 = vpack.c.b16 %v1128, %v1127
    %v1610 = vpack.c.b16 %v1130, %v1129
    %v1611 = vpack.c.b16 %v1132, %v1131
    %v1612 = vpack.c.b16 %v1134, %v1133
    %v1613 = vpack.c.b16 %v1136, %v1135
    %v1614 = vpack.c.b16 %v1138, %v1137
    %v1615 = vpack.c.b16 %v1140, %v1139
    %v1616 = vpack.c.b16 %v1142, %v1141
    %v1617 = vpack.c.b16 %v1144, %v1143
    %v1618 = vpack.c.b16 %v1146, %v1145
    %v1619 = vpack.c.b16 %v1148, %v1147
    %v1620 = vpack.c.b16 %v1150, %v1149
    %v1621 = vpack.c.b16 %v1152, %v1151
    %v1622 = vpack.c.b16 %v1154, %v1153
    %v1623 = vpack.c.b16 %v1156, %v1155
    %v1624 = vpack.c.b16 %v1158, %v1157
    %v1625 = vpack.c.b16 %v1160, %v1159
    %v1626 = vpack.c.b16 %v1162, %v1161
    %v1627 = vpack.c.b16 %v1164, %v1163
    %v1628 = vpack.c.b16 %v1166, %v1165
    %v1629 = vpack.c.b16 %v1168, %v1167
    %v1630 = vpack.c.b16 %v1170, %v1169
    %v1631 = vpack.c.b16 %v1172, %v1171
    %v1632 = vpack.c.b16 %v1174, %v1173
    %v1633 = vpack.c.b16 %v1176, %v1175
    %v1634 = vpack.c.b16 %v1178, %v1177
    %v1635 = vpack.c.b16 %v1180, %v1179
    %v1636 = vpack.c.b16 %v1182, %v1181
    %v1637 = vpack.c.b16 %v1184, %v1183
    %v1638 = vpack.c.b16 %v1186, %v1185
    %v1639 = vpack.c.b16 %v1188, %v1187
    %v1640 = vpack.c.b16 %v1190, %v1189
    %v1641 = vpack.c.b16 %v1192, %v1191
    %v1642 = vpack.c.b16 %v1194, %v1193
    %v1643 = vpack.c.b16 %v1196, %v1195
    %v1644 = vpack.c.b16 %v1198, %v1197
    %v1645 = vpack.c.b16 %v1200, %v1199
    %v1646 = vpack.c.b16 %v1202, %v1201
    %v1647 = vpack.c.b16 %v1204, %v1203
    %v1648 = vpack.c.b16 %v1206, %v1205
    %v1649 = vpack.c.b16 %v1208, %v1207
    %v1650 = vpack.c.b16 %v1210, %v1209
    %v1651 = vpack.c.b16 %v1212, %v1211
    %v1652 = vpack.c.b16 %v1214, %v1213
    %v1653 = vpack.c.b16 %v1216, %v1215
    %v1654 = vpack.c.b16 %v1218, %v1217
    %v1655 = vpack.c.b16 %v1220, %v1219
    %v1656 = vpack.c.b16 %v1222, %v1221
    %v1657 = vpack.c.b16 %v1224, %v1223
    %v1658 = vpack.c.b16 %v1226, %v1225
    %v1659 = vpack.c.b16 %v1228, %v1227
    %v1660 = vpack.c.b16 %v1230, %v1229
    %v1661 = vpack.c.b16 %v1232, %v1231
    %v1662 = vpack.c.b16 %v1234, %v1233
    %v1663 = vpack.c.b16 %v1236, %v1235
    %v1664 = vpack.c.b16 %v1238, %v1237
    %v1665 = vpack.c.b16 %v1240, %v1239
    %v1666 = vpack.c.b16 %v1242, %v1241
    %v1667 = vpack.c.b16 %v1244, %v1243
    %v1668 = vpack.c.b16 %v1246, %v1245
    %v1669 = vpack.c.b16 %v1248, %v1247
    %v1670 = vpack.c.b16 %v1250, %v1249
    %v1671 = vpack.c.b16 %v1252, %v1251
    %v1672 = vpack.c.b16 %v1254, %v1253
    %v1673 = vpack.c.b16 %v1256, %v1255
    %v1674 = vpack.c.b16 %v1258, %v1257
    %v1675 = vpack.c.b16 %v1260, %v1259
    %v1676 = vpack.c.b16 %v1262, %v1261
    %v1677 = vpack.c.b16 %v1264, %v1263
    %v1678 = vpack.c.b16 %v1266, %v1265
    %v1679 = vpack.c.b16 %v1268, %v1267
    %v1680 = vpack.c.b16 %v1270, %v1269
    %v1681 = vpack.c.b16 %v1272, %v1271
    %v1682 = vpack.c.b16 %v1274, %v1273
    %v1683 = vpack.c.b16 %v1276, %v1275
    %v1684 = vpack.c.b16 %v1278, %v1277
    %v1685 = vpack.c.b16 %v1280, %v1279
    %v1686 = vpack.c.b16 %v1282, %v1281
    %v1687 = vpack.c.b16 %v1284, %v1283
    %v1688 = vpack.c.b16 %v1286, %v1285
    %v1689 = vpack.c.b16 %v1288, %v1287
    %v1690 = vpack.c.b16 %v1290, %v1289
    %v1691 = vpack.c.b16 %v1292, %v1291
    %v1692 = vpack.c.b16 %v1294, %v1293
    %v1693 = vpack.c.b16 %v1296, %v1295
    %v1694 = vpack.c.b16 %v1298, %v1297
    %v1695 = vpack.c.b16 %v1300, %v1299
    %v1696 = vpack.c.b16 %v1302, %v1301
    %v1697 = vpack.c.b16 %v1304, %v1303
    %v1698 = vpack.c.b16 %v1306, %v1305
    %v1699 = vpack.c.b16 %v1308, %v1307
    %v1700 = vpack.c.b16 %v1310, %v1309
    %v1701 = vpack.c.b16 %v1312, %v1311
    %v1702 = vpack.c.b16 %v1314, %v1313
    %v1703 = vpack.c.b16 %v1316, %v1315
    %v1704 = vpack.c.b16 %v1318, %v1317
    %v1705 = vpack.c.b16 %v1320, %v1319
    %v1706 = vpack.c.b16 %v1322, %v1321
    %v1707 = vpack.c.b16 %v1324, %v1323
    %v1708 = vpack.c.b16 %v1326, %v1325
    %v1709 = vpack.c.b16 %v1328, %v1327
    %v1710 = vpack.c.b16 %v1330, %v1329
    %v1711 = vpack.c.b16 %v1332, %v1331
    %v1712 = vpack.c.b16 %v1334, %v1333
    %v1713 = vpack.c.b16 %v1336, %v1335
    %v1714 = vpack.c.b16 %v1338, %v1337
    %v1715 = vpack.c.b16 %v1340, %v1339
    %v1716 = vpack.c.b16 %v1342, %v1341
    %v1717 = vpack.c.b16 %v1344, %v1343
    %v1718 = vpack.c.b16 %v1346, %v1345
    %v1719 = vpack.c.b16 %v1348, %v1347
    %v1720 = vpack.c.b16 %v1350, %v1349
    %v1721 = vpack.c.b16 %v1352, %v1351
    %v1722 = vpack.c.b16 %v1354, %v1353
    %v1723 = vpack.c.b16 %v1356, %v1355
    %v1724 = vpack.c.b16 %v1358, %v1357
    %v1725 = vpack.c.b16 %v1360, %v1359
    %v1726 = vpack.c.b16 %v1362, %v1361
    %v1727 = vpack.c.b16 %v1364, %v1363
    %v1728 = vpack.c.b16 %v1366, %v1365
    %v1729 = vpack.c.b16 %v1368, %v1367
    %v1730 = vpack.c.b16 %v1370, %v1369
    %v1731 = vpack.c.b16 %v1372, %v1371
    %v1732 = vpack.c.b16 %v1374, %v1373
    %v1733 = vpack.c.b16 %v1376, %v1375
    %v1734 = vpack.c.b16 %v1378, %v1377
    %v1735 = vpack.c.b16 %v1380, %v1379
    %v1736 = vpack.c.b16 %v1382, %v1381
    %v1737 = vpack.c.b16 %v1384, %v1383
    %v1738 = vpack.c.b16 %v1386, %v1385
    %v1739 = vpack.c.b16 %v1388, %v1387
    %v1740 = vpack.c.b16 %v1390, %v1389
    %v1741 = vpack.c.b16 %v1392, %v1391
    %v1742 = vpack.c.b16 %v1394, %v1393
    %v1743 = vpack.c.b16 %v1396, %v1395
    %v1744 = vpack.c.b16 %v1398, %v1397
    %v1745 = vpack.c.b16 %v1400, %v1399
    %v1746 = vpack.c.b16 %v1402, %v1401
    %v1747 = vpack.c.b16 %v1404, %v1403
    %v1748 = vpack.c.b16 %v1406, %v1405
    %v1749 = vpack.c.b16 %v1408, %v1407
    %v1750 = vpack.c.b16 %v1410, %v1409
    %v1751 = vpack.c.b16 %v1412, %v1411
    %v1752 = vpack.c.b16 %v1414, %v1413
    %v1753 = vpack.c.b16 %v1416, %v1415
    %v1754 = vpack.c.b16 %v1418, %v1417
    %v1755 = vpack.c.b16 %v1420, %v1419
    %v1756 = vpack.c.b16 %v1422, %v1421
    %v1757 = vpack.c.b16 %v1424, %v1423
    %v1758 = vpack.c.b16 %v1426, %v1425
    %v1759 = vpack.c.b16 %v1428, %v1427
    %v1760 = vpack.c.b16 %v1430, %v1429
    %v1761 = vpack.c.b16 %v1432, %v1431
    %v1762 = vpack.c.b16 %v1434, %v1433
    %v1763 = vpack.c.b16 %v1436, %v1435
    %v1764 = vpack.c.b16 %v1438, %v1437
    %v1765 = vpack.c.b16 %v1440, %v1439
    %v1766 = vpack.c.b16 %v1442, %v1441
    %v1767 = vpack.c.b16 %v1444, %v1443
    %v1768 = vpack.c.b16 %v1446, %v1445
    %v1769 = vpack.c.b16 %v1448, %v1447
    %v1770 = vpack.c.b16 %v1450, %v1449
    %v1771 = vpack.c.b16 %v1452, %v1451
    %v1772 = vpack.c.b16 %v1454, %v1453
    %v1773 = vpack.c.b16 %v1456, %v1455
    %v1774 = vpack.c.b16 %v1458, %v1457
    %v1775 = vpack.c.b16 %v1460, %v1459
    %v1776 = vpack.c.b16 %v1462, %v1461
    %v1777 = vpack.c.b16 %v1464, %v1463
    %v1778 = vpack.c.b16 %v1466, %v1465
    %v1779 = vpack.c.b16 %v1468, %v1467
    %v1780 = vpack.c.b16 %v1470, %v1469
    %v1781 = vpack.c.b16 %v1472, %v1471
    %v1782 = vpack.c.b16 %v1474, %v1473
    %v1783 = vpack.c.b16 %v1476, %v1475
    %v1784 = vpack.c.b16 %v1478, %v1477
    %v1785 = vpack.c.b16 %v1480, %v1479
    %v1786 = vpack.c.b16 %v1482, %v1481
    %v1787 = vpack.c.b16 %v1484, %v1483
    %v1788 = vpack.c.b16 %v1486, %v1485
    %v1789 = vpack.c.b16 %v1488, %v1487
    %v1790 = vpack.c.b16 %v1490, %v1489
    %v1791 = vpack.c.b16 %v1492, %v1491
    %v1792 = vpack.c.b16 %v1494, %v1493
    %v1793 = vpack.c.b16 %v1496, %v1495
    %v1794 = vpack.c.b16 %v1498, %v1497
    %v1795 = vpack.c.b16 %v1500, %v1499
    %v1796 = vpack.c.b16 %v1502, %v1501
    %v1797 = vpack.c.b16 %v1504, %v1503
    %v1798 = vpack.c.b16 %v1506, %v1505
    %v1799 = vpack.c.b16 %v1508, %v1507
    %v1800 = vpack.c.b16 %v1510, %v1509
    %v1801 = vpack.c.b16 %v1512, %v1511
    %v1802 = vpack.c.b16 %v1514, %v1513
    %v1803 = vpack.c.b16 %v1516, %v1515
    %v1804 = vpack.c.b16 %v1518, %v1517
    %v1805 = vpack.c.b16 %v1520, %v1519
    %v1806 = vpack.c.b16 %v1522, %v1521
    %v1807 = vpack.c.b16 %v1524, %v1523
    %v1808 = vpack.c.b16 %v1526, %v1525
    %v1809 = vpack.c.b16 %v1528, %v1527
    %v1810 = vpack.c.b16 %v1530, %v1529
    %v1811 = vpack.c.b16 %v1532, %v1531
    %v1812 = vpack.c.b16 %v1534, %v1533
    %v1813 = vpack.c.b16 %v1536, %v1535
    %v1814 = vpack.c.b16 %v1538, %v1537
    %v1815 = vpack.c.b16 %v1540, %v1539
    %v1816 = vpack.c.b16 %v1542, %v1541
    %v1817 = vpack.c.b16 %v1544, %v1543
    %v1818 = vpack.c.b16 %v1546, %v1545
    %v1819 = vpack.c.b16 %v1548, %v1547
    %v1820 = vpack.c.b16 %v1550, %v1549
    %v1821 = vpack.c.b16 %v1552, %v1551
    %v1822 = vpack.c.b16 %v1554, %v1553
    %v1823 = vpack.c.b16 %v1556, %v1555
    %v1824 = vpack.c.b16 %v1558, %v1557
    %v1825 = vpack.c.b16 %v1560, %v1559
    %v1826 = vpack.c.b16 %v1562, %v1561
    %v1827 = vpack.c.b16 %v1564, %v1563
    %v1828 = vpack.c.b16 %v1566, %v1565
    %v1829 = vpack.c.b16 %v1568, %v1567
    %v1830 = vpack.c.b16 %v1570, %v1569
    %v1831 = vpack.c.b16 %v1572, %v1571
    %v1832 = vpack.c.b16 %v1574, %v1573
    %v1833 = vpack.c.b16 %v1576, %v1575
    %v1834 = vpack.c.b16 %v1578, %v1577
    %v1835 = vpack.c.b16 %v1580, %v1579
    %v1836 = vpack.c.b16 %v1582, %v1581
    %v1837 = vpack.c.b16 %v1584, %v1583
    %v1838 = vpack.c.b16 %v1586, %v1585
    %v1839 = vpack.c.b16 %v1588, %v1587
    %v1840 = vpack.c.b16 %v1589, %v1589
    %vm2091 = vcmask 302080
    %v2093 = vsel %vm2091, %v79, 0
    %vm2095 = vcmask 1041408
    %vm2096 = vcmask 1042432
    %v2097 = vsel %vm2095, 4294967295, 65535
    %v2098 = vsel %vm2096, %v2097, 0
    %v2100 = vand.u32 %v1840, %v2098
    %2102 = vmatprep.subr.bf16.mxu0 0
    %2103 = vmatpush1.bf16.msra.mxu0 %v1590
    %2104 = vmatprep.subr.bf16.mxu0 0
    %2105 = vmatpush1.bf16.msra.mxu0 %v1591
    %2106 = vmatprep.subr.bf16.mxu0 0
    %2107 = vmatpush1.bf16.msra.mxu0 %v1592
    %2108 = vmatprep.subr.bf16.mxu0 0
    %2109 = vmatpush1.bf16.msra.mxu0 %v1593
    %2110 = vmatprep.subr.bf16.mxu0 0
    %2111 = vmatpush1.bf16.msra.mxu0 %v1594
    %2112 = vmatprep.subr.bf16.mxu0 0
    %2113 = vmatpush1.bf16.msra.mxu0 %v1595
    %2114 = vmatprep.subr.bf16.mxu0 0
    %2115 = vmatpush1.bf16.msra.mxu0 %v1596
    %2116 = vmatprep.subr.bf16.mxu0 0
    %2117 = vmatpush1.bf16.msra.mxu0 %v1597
    %2118 = vmatprep.subr.bf16.mxu0 0
    %2119 = vmatpush1.bf16.msra.mxu0 %v1598
    %2120 = vmatprep.subr.bf16.mxu0 0
    %2121 = vmatpush1.bf16.msra.mxu0 %v1599
    %2122 = vmatprep.subr.bf16.mxu0 0
    %2123 = vmatpush1.bf16.msra.mxu0 %v1600
    %2124 = vmatprep.subr.bf16.mxu0 0
    %2125 = vmatpush1.bf16.msra.mxu0 %v1601
    %2126 = vmatprep.subr.bf16.mxu0 0
    %2127 = vmatpush1.bf16.msra.mxu0 %v1602
    %2128 = vmatprep.subr.bf16.mxu0 0
    %2129 = vmatpush1.bf16.msra.mxu0 %v1603
    %2130 = vmatprep.subr.bf16.mxu0 0
    %2131 = vmatpush1.bf16.msra.mxu0 %v1604
    %2132 = vmatprep.subr.bf16.mxu0 0
    %2133 = vmatpush1.bf16.msra.mxu0 %v1605
    %2134 = vmatprep.mubr.bf16.mxu0 %v49
    %2135 = vmatmul.mubr.bf16.gmra.mrb[0].mxu0 %v48
    %v2136 = vpop.f32.mrb[0].mxu0
    %v2137 = vadd.f32 %v586, %v2136
    %v2138 = vpop.f32.mrb[0].mxu0
    %v2139 = vpop.f32.mrb[0].mxu0
    %v2140 = vpop.f32.mrb[0].mxu0
    %2141 = vdwg.mxu0
    %2142 = vmatprep.subr.bf16.mxu0 0
    %2143 = vmatpush1.bf16.msra.mxu0 %v1606
    %2144 = vmatprep.subr.bf16.mxu0 0
    %2145 = vmatpush1.bf16.msra.mxu0 %v1607
    %2146 = vmatprep.subr.bf16.mxu0 0
    %2147 = vmatpush1.bf16.msra.mxu0 %v1608
    %2148 = vmatprep.subr.bf16.mxu0 0
    %2149 = vmatpush1.bf16.msra.mxu0 %v1609
    %2150 = vmatprep.subr.bf16.mxu0 0
    %2151 = vmatpush1.bf16.msra.mxu0 %v1610
    %2152 = vmatprep.subr.bf16.mxu0 0
    %2153 = vmatpush1.bf16.msra.mxu0 %v1611
    %2154 = vmatprep.subr.bf16.mxu0 0
    %2155 = vmatpush1.bf16.msra.mxu0 %v1612
    %2156 = vmatprep.subr.bf16.mxu0 0
    %2157 = vmatpush1.bf16.msra.mxu0 %v1613
    %2158 = vmatprep.subr.bf16.mxu0 0
    %2159 = vmatpush1.bf16.msra.mxu0 %v1614
    %2160 = vmatprep.subr.bf16.mxu0 0
    %2161 = vmatpush1.bf16.msra.mxu0 %v1615
    %2162 = vmatprep.subr.bf16.mxu0 0
    %2163 = vmatpush1.bf16.msra.mxu0 %v1616
    %2164 = vmatprep.subr.bf16.mxu0 0
    %2165 = vmatpush1.bf16.msra.mxu0 %v1617
    %2166 = vmatprep.subr.bf16.mxu0 0
    %2167 = vmatpush1.bf16.msra.mxu0 %v1618
    %2168 = vmatprep.subr.bf16.mxu0 0
    %2169 = vmatpush1.bf16.msra.mxu0 %v1619
    %2170 = vmatprep.subr.bf16.mxu0 0
    %2171 = vmatpush1.bf16.msra.mxu0 %v1620
    %2172 = vmatprep.subr.bf16.mxu0 0
    %2173 = vmatpush1.bf16.msra.mxu0 %v1621
    %2174 = vmatprep.mubr.bf16.mxu0 %v51
    %2175 = vmatmul.mubr.bf16.gmra.mrb[0].mxu0 %v50
    %v2176 = vpop.f32.mrb[0].mxu0
    %v2177 = vadd.f32 %v2137, %v2176
    %v2178 = vpop.f32.mrb[0].mxu0
    %v2179 = vpop.f32.mrb[0].mxu0
    %v2180 = vpop.f32.mrb[0].mxu0
    %2181 = vdwg.mxu0
    %2182 = vmatprep.subr.bf16.mxu0 0
    %2183 = vmatpush1.bf16.msra.mxu0 %v1622
    %2184 = vmatprep.subr.bf16.mxu0 0
    %2185 = vmatpush1.bf16.msra.mxu0 %v1623
    %2186 = vmatprep.subr.bf16.mxu0 0
    %2187 = vmatpush1.bf16.msra.mxu0 %v1624
    %2188 = vmatprep.subr.bf16.mxu0 0
    %2189 = vmatpush1.bf16.msra.mxu0 %v1625
    %2190 = vmatprep.subr.bf16.mxu0 0
    %2191 = vmatpush1.bf16.msra.mxu0 %v1626
    %2192 = vmatprep.subr.bf16.mxu0 0
    %2193 = vmatpush1.bf16.msra.mxu0 %v1627
    %2194 = vmatprep.subr.bf16.mxu0 0
    %2195 = vmatpush1.bf16.msra.mxu0 %v1628
    %2196 = vmatprep.subr.bf16.mxu0 0
    %2197 = vmatpush1.bf16.msra.mxu0 %v1629
    %2198 = vmatprep.subr.bf16.mxu0 0
    %2199 = vmatpush1.bf16.msra.mxu0 %v1630
    %2200 = vmatprep.subr.bf16.mxu0 0
    %2201 = vmatpush1.bf16.msra.mxu0 %v1631
    %2202 = vmatprep.subr.bf16.mxu0 0
    %2203 = vmatpush1.bf16.msra.mxu0 %v1632
    %2204 = vmatprep.subr.bf16.mxu0 0
    %2205 = vmatpush1.bf16.msra.mxu0 %v1633
    %2206 = vmatprep.subr.bf16.mxu0 0
    %2207 = vmatpush1.bf16.msra.mxu0 %v1634
    %2208 = vmatprep.subr.bf16.mxu0 0
    %2209 = vmatpush1.bf16.msra.mxu0 %v1635
    %2210 = vmatprep.subr.bf16.mxu0 0
    %2211 = vmatpush1.bf16.msra.mxu0 %v1636
    %2212 = vmatprep.subr.bf16.mxu0 0
    %2213 = vmatpush1.bf16.msra.mxu0 %v1637
    %2214 = vmatprep.mubr.bf16.mxu0 %v53
    %2215 = vmatmul.mubr.bf16.gmra.mrb[0].mxu0 %v52
    %v2216 = vpop.f32.mrb[0].mxu0
    %v2217 = vadd.f32 %v2177, %v2216
    %v2218 = vpop.f32.mrb[0].mxu0
    %v2219 = vpop.f32.mrb[0].mxu0
    %v2220 = vpop.f32.mrb[0].mxu0
    %2221 = vdwg.mxu0
    %2222 = vmatprep.subr.bf16.mxu0 0
    %2223 = vmatpush1.bf16.msra.mxu0 %v1638
    %2224 = vmatprep.subr.bf16.mxu0 0
    %2225 = vmatpush1.bf16.msra.mxu0 %v1639
    %2226 = vmatprep.subr.bf16.mxu0 0
    %2227 = vmatpush1.bf16.msra.mxu0 %v1640
    %2228 = vmatprep.subr.bf16.mxu0 0
    %2229 = vmatpush1.bf16.msra.mxu0 %v1641
    %2230 = vmatprep.subr.bf16.mxu0 0
    %2231 = vmatpush1.bf16.msra.mxu0 %v1642
    %2232 = vmatprep.subr.bf16.mxu0 0
    %2233 = vmatpush1.bf16.msra.mxu0 %v1643
    %2234 = vmatprep.subr.bf16.mxu0 0
    %2235 = vmatpush1.bf16.msra.mxu0 %v1644
    %2236 = vmatprep.subr.bf16.mxu0 0
    %2237 = vmatpush1.bf16.msra.mxu0 %v1645
    %2238 = vmatprep.subr.bf16.mxu0 0
    %2239 = vmatpush1.bf16.msra.mxu0 %v1646
    %2240 = vmatprep.subr.bf16.mxu0 0
    %2241 = vmatpush1.bf16.msra.mxu0 %v1647
    %2242 = vmatprep.subr.bf16.mxu0 0
    %2243 = vmatpush1.bf16.msra.mxu0 %v1648
    %2244 = vmatprep.subr.bf16.mxu0 0
    %2245 = vmatpush1.bf16.msra.mxu0 %v1649
    %2246 = vmatprep.subr.bf16.mxu0 0
    %2247 = vmatpush1.bf16.msra.mxu0 %v1650
    %2248 = vmatprep.subr.bf16.mxu0 0
    %2249 = vmatpush1.bf16.msra.mxu0 %v1651
    %2250 = vmatprep.subr.bf16.mxu0 0
    %2251 = vmatpush1.bf16.msra.mxu0 %v1652
    %2252 = vmatprep.subr.bf16.mxu0 0
    %2253 = vmatpush1.bf16.msra.mxu0 %v1653
    %2254 = vmatprep.mubr.bf16.mxu0 %v55
    %2255 = vmatmul.mubr.bf16.gmra.mrb[0].mxu0 %v54
    %v2256 = vpop.f32.mrb[0].mxu0
    %v2257 = vadd.f32 %v2217, %v2256
    %v2258 = vpop.f32.mrb[0].mxu0
    %v2259 = vpop.f32.mrb[0].mxu0
    %v2260 = vpop.f32.mrb[0].mxu0
    %2261 = vdwg.mxu0
    %2262 = vmatprep.subr.bf16.mxu0 0
    %2263 = vmatpush1.bf16.msra.mxu0 %v1654
    %2264 = vmatprep.subr.bf16.mxu0 0
    %2265 = vmatpush1.bf16.msra.mxu0 %v1655
    %2266 = vmatprep.subr.bf16.mxu0 0
    %2267 = vmatpush1.bf16.msra.mxu0 %v1656
    %2268 = vmatprep.subr.bf16.mxu0 0
    %2269 = vmatpush1.bf16.msra.mxu0 %v1657
    %2270 = vmatprep.subr.bf16.mxu0 0
    %2271 = vmatpush1.bf16.msra.mxu0 %v1658
    %2272 = vmatprep.subr.bf16.mxu0 0
    %2273 = vmatpush1.bf16.msra.mxu0 %v1659
    %2274 = vmatprep.subr.bf16.mxu0 0
    %2275 = vmatpush1.bf16.msra.mxu0 %v1660
    %2276 = vmatprep.subr.bf16.mxu0 0
    %2277 = vmatpush1.bf16.msra.mxu0 %v1661
    %2278 = vmatprep.subr.bf16.mxu0 0
    %2279 = vmatpush1.bf16.msra.mxu0 %v1662
    %2280 = vmatprep.subr.bf16.mxu0 0
    %2281 = vmatpush1.bf16.msra.mxu0 %v1663
    %2282 = vmatprep.subr.bf16.mxu0 0
    %2283 = vmatpush1.bf16.msra.mxu0 %v1664
    %2284 = vmatprep.subr.bf16.mxu0 0
    %2285 = vmatpush1.bf16.msra.mxu0 %v1665
    %2286 = vmatprep.subr.bf16.mxu0 0
    %2287 = vmatpush1.bf16.msra.mxu0 %v1666
    %2288 = vmatprep.subr.bf16.mxu0 0
    %2289 = vmatpush1.bf16.msra.mxu0 %v1667
    %2290 = vmatprep.subr.bf16.mxu0 0
    %2291 = vmatpush1.bf16.msra.mxu0 %v1668
    %2292 = vmatprep.subr.bf16.mxu0 0
    %2293 = vmatpush1.bf16.msra.mxu0 %v1669
    %2294 = vmatprep.mubr.bf16.mxu0 %v57
    %2295 = vmatmul.mubr.bf16.gmra.mrb[0].mxu0 %v56
    %v2296 = vpop.f32.mrb[0].mxu0
    %v2297 = vadd.f32 %v2257, %v2296
    %v2298 = vpop.f32.mrb[0].mxu0
    %v2299 = vpop.f32.mrb[0].mxu0
    %v2300 = vpop.f32.mrb[0].mxu0
    %2301 = vdwg.mxu0
    %2302 = vmatprep.subr.bf16.mxu0 0
    %2303 = vmatpush1.bf16.msra.mxu0 %v1670
    %2304 = vmatprep.subr.bf16.mxu0 0
    %2305 = vmatpush1.bf16.msra.mxu0 %v1671
    %2306 = vmatprep.subr.bf16.mxu0 0
    %2307 = vmatpush1.bf16.msra.mxu0 %v1672
    %2308 = vmatprep.subr.bf16.mxu0 0
    %2309 = vmatpush1.bf16.msra.mxu0 %v1673
    %2310 = vmatprep.subr.bf16.mxu0 0
    %2311 = vmatpush1.bf16.msra.mxu0 %v1674
    %2312 = vmatprep.subr.bf16.mxu0 0
    %2313 = vmatpush1.bf16.msra.mxu0 %v1675
    %2314 = vmatprep.subr.bf16.mxu0 0
    %2315 = vmatpush1.bf16.msra.mxu0 %v1676
    %2316 = vmatprep.subr.bf16.mxu0 0
    %2317 = vmatpush1.bf16.msra.mxu0 %v1677
    %2318 = vmatprep.subr.bf16.mxu0 0
    %2319 = vmatpush1.bf16.msra.mxu0 %v1678
    %2320 = vmatprep.subr.bf16.mxu0 0
    %2321 = vmatpush1.bf16.msra.mxu0 %v1679
    %2322 = vmatprep.subr.bf16.mxu0 0
    %2323 = vmatpush1.bf16.msra.mxu0 %v1680
    %2324 = vmatprep.subr.bf16.mxu0 0
    %2325 = vmatpush1.bf16.msra.mxu0 %v1681
    %2326 = vmatprep.subr.bf16.mxu0 0
    %2327 = vmatpush1.bf16.msra.mxu0 %v1682
    %2328 = vmatprep.subr.bf16.mxu0 0
    %2329 = vmatpush1.bf16.msra.mxu0 %v1683
    %2330 = vmatprep.subr.bf16.mxu0 0
    %2331 = vmatpush1.bf16.msra.mxu0 %v1684
    %2332 = vmatprep.subr.bf16.mxu0 0
    %2333 = vmatpush1.bf16.msra.mxu0 %v1685
    %2334 = vmatprep.mubr.bf16.mxu0 %v59
    %2335 = vmatmul.mubr.bf16.gmra.mrb[0].mxu0 %v58
    %v2336 = vpop.f32.mrb[0].mxu0
    %v2337 = vadd.f32 %v2297, %v2336
    %v2338 = vpop.f32.mrb[0].mxu0
    %v2339 = vpop.f32.mrb[0].mxu0
    %v2340 = vpop.f32.mrb[0].mxu0
    %2341 = vdwg.mxu0
    %2342 = vmatprep.subr.bf16.mxu0 0
    %2343 = vmatpush1.bf16.msra.mxu0 %v1686
    %2344 = vmatprep.subr.bf16.mxu0 0
    %2345 = vmatpush1.bf16.msra.mxu0 %v1687
    %2346 = vmatprep.subr.bf16.mxu0 0
    %2347 = vmatpush1.bf16.msra.mxu0 %v1688
    %2348 = vmatprep.subr.bf16.mxu0 0
    %2349 = vmatpush1.bf16.msra.mxu0 %v1689
    %2350 = vmatprep.subr.bf16.mxu0 0
    %2351 = vmatpush1.bf16.msra.mxu0 %v1690
    %2352 = vmatprep.subr.bf16.mxu0 0
    %2353 = vmatpush1.bf16.msra.mxu0 %v1691
    %2354 = vmatprep.subr.bf16.mxu0 0
    %2355 = vmatpush1.bf16.msra.mxu0 %v1692
    %2356 = vmatprep.subr.bf16.mxu0 0
    %2357 = vmatpush1.bf16.msra.mxu0 %v1693
    %2358 = vmatprep.subr.bf16.mxu0 0
    %2359 = vmatpush1.bf16.msra.mxu0 %v1694
    %2360 = vmatprep.subr.bf16.mxu0 0
    %2361 = vmatpush1.bf16.msra.mxu0 %v1695
    %2362 = vmatprep.subr.bf16.mxu0 0
    %2363 = vmatpush1.bf16.msra.mxu0 %v1696
    %2364 = vmatprep.subr.bf16.mxu0 0
    %2365 = vmatpush1.bf16.msra.mxu0 %v1697
    %2366 = vmatprep.subr.bf16.mxu0 0
    %2367 = vmatpush1.bf16.msra.mxu0 %v1698
    %2368 = vmatprep.subr.bf16.mxu0 0
    %2369 = vmatpush1.bf16.msra.mxu0 %v1699
    %2370 = vmatprep.subr.bf16.mxu0 0
    %2371 = vmatpush1.bf16.msra.mxu0 %v1700
    %2372 = vmatprep.subr.bf16.mxu0 0
    %2373 = vmatpush1.bf16.msra.mxu0 %v1701
    %2374 = vmatprep.mubr.bf16.mxu0 %v61
    %2375 = vmatmul.mubr.bf16.gmra.mrb[0].mxu0 %v60
    %v2376 = vpop.f32.mrb[0].mxu0
    %v2377 = vadd.f32 %v2337, %v2376
    %v2378 = vpop.f32.mrb[0].mxu0
    %v2379 = vpop.f32.mrb[0].mxu0
    %v2380 = vpop.f32.mrb[0].mxu0
    %2381 = vdwg.mxu0
    %2382 = vmatprep.subr.bf16.mxu0 0
    %2383 = vmatpush1.bf16.msra.mxu0 %v1702
    %2384 = vmatprep.subr.bf16.mxu0 0
    %2385 = vmatpush1.bf16.msra.mxu0 %v1703
    %2386 = vmatprep.subr.bf16.mxu0 0
    %2387 = vmatpush1.bf16.msra.mxu0 %v1704
    %2388 = vmatprep.subr.bf16.mxu0 0
    %2389 = vmatpush1.bf16.msra.mxu0 %v1705
    %2390 = vmatprep.subr.bf16.mxu0 0
    %2391 = vmatpush1.bf16.msra.mxu0 %v1706
    %2392 = vmatprep.subr.bf16.mxu0 0
    %2393 = vmatpush1.bf16.msra.mxu0 %v1707
    %2394 = vmatprep.subr.bf16.mxu0 0
    %2395 = vmatpush1.bf16.msra.mxu0 %v1708
    %2396 = vmatprep.subr.bf16.mxu0 0
    %2397 = vmatpush1.bf16.msra.mxu0 %v1709
    %2398 = vmatprep.subr.bf16.mxu0 0
    %2399 = vmatpush1.bf16.msra.mxu0 %v1710
    %2400 = vmatprep.subr.bf16.mxu0 0
    %2401 = vmatpush1.bf16.msra.mxu0 %v1711
    %2402 = vmatprep.subr.bf16.mxu0 0
    %2403 = vmatpush1.bf16.msra.mxu0 %v1712
    %2404 = vmatprep.subr.bf16.mxu0 0
    %2405 = vmatpush1.bf16.msra.mxu0 %v1713
    %2406 = vmatprep.subr.bf16.mxu0 0
    %2407 = vmatpush1.bf16.msra.mxu0 %v1714
    %2408 = vmatprep.subr.bf16.mxu0 0
    %2409 = vmatpush1.bf16.msra.mxu0 %v1715
    %2410 = vmatprep.subr.bf16.mxu0 0
    %2411 = vmatpush1.bf16.msra.mxu0 %v1716
    %2412 = vmatprep.subr.bf16.mxu0 0
    %2413 = vmatpush1.bf16.msra.mxu0 %v1717
    %2414 = vmatprep.mubr.bf16.mxu0 %v63
    %2415 = vmatmul.mubr.bf16.gmra.mrb[0].mxu0 %v62
    %v2416 = vpop.f32.mrb[0].mxu0
    %v2417 = vadd.f32 %v2377, %v2416
    %v2418 = vpop.f32.mrb[0].mxu0
    %v2419 = vpop.f32.mrb[0].mxu0
    %v2420 = vpop.f32.mrb[0].mxu0
    %2421 = vdwg.mxu0
    %2422 = vmatprep.subr.bf16.mxu0 0
    %2423 = vmatpush1.bf16.msra.mxu0 %v1718
    %2424 = vmatprep.subr.bf16.mxu0 0
    %2425 = vmatpush1.bf16.msra.mxu0 %v1719
    %2426 = vmatprep.subr.bf16.mxu0 0
    %2427 = vmatpush1.bf16.msra.mxu0 %v1720
    %2428 = vmatprep.subr.bf16.mxu0 0
    %2429 = vmatpush1.bf16.msra.mxu0 %v1721
    %2430 = vmatprep.subr.bf16.mxu0 0
    %2431 = vmatpush1.bf16.msra.mxu0 %v1722
    %2432 = vmatprep.subr.bf16.mxu0 0
    %2433 = vmatpush1.bf16.msra.mxu0 %v1723
    %2434 = vmatprep.subr.bf16.mxu0 0
    %2435 = vmatpush1.bf16.msra.mxu0 %v1724
    %2436 = vmatprep.subr.bf16.mxu0 0
    %2437 = vmatpush1.bf16.msra.mxu0 %v1725
    %2438 = vmatprep.subr.bf16.mxu0 0
    %2439 = vmatpush1.bf16.msra.mxu0 %v1726
    %2440 = vmatprep.subr.bf16.mxu0 0
    %2441 = vmatpush1.bf16.msra.mxu0 %v1727
    %2442 = vmatprep.subr.bf16.mxu0 0
    %2443 = vmatpush1.bf16.msra.mxu0 %v1728
    %2444 = vmatprep.subr.bf16.mxu0 0
    %2445 = vmatpush1.bf16.msra.mxu0 %v1729
    %2446 = vmatprep.subr.bf16.mxu0 0
    %2447 = vmatpush1.bf16.msra.mxu0 %v1730
    %2448 = vmatprep.subr.bf16.mxu0 0
    %2449 = vmatpush1.bf16.msra.mxu0 %v1731
    %2450 = vmatprep.subr.bf16.mxu0 0
    %2451 = vmatpush1.bf16.msra.mxu0 %v1732
    %2452 = vmatprep.subr.bf16.mxu0 0
    %2453 = vmatpush1.bf16.msra.mxu0 %v1733
    %2454 = vmatprep.mubr.bf16.mxu0 %v65
    %2455 = vmatmul.mubr.bf16.gmra.mrb[0].mxu0 %v64
    %v2456 = vpop.f32.mrb[0].mxu0
    %v2457 = vadd.f32 %v2417, %v2456
    %v2458 = vpop.f32.mrb[0].mxu0
    %v2459 = vpop.f32.mrb[0].mxu0
    %v2460 = vpop.f32.mrb[0].mxu0
    %2461 = vdwg.mxu0
    %2462 = vmatprep.subr.bf16.mxu0 0
    %2463 = vmatpush1.bf16.msra.mxu0 %v1734
    %2464 = vmatprep.subr.bf16.mxu0 0
    %2465 = vmatpush1.bf16.msra.mxu0 %v1735
    %2466 = vmatprep.subr.bf16.mxu0 0
    %2467 = vmatpush1.bf16.msra.mxu0 %v1736
    %2468 = vmatprep.subr.bf16.mxu0 0
    %2469 = vmatpush1.bf16.msra.mxu0 %v1737
    %2470 = vmatprep.subr.bf16.mxu0 0
    %2471 = vmatpush1.bf16.msra.mxu0 %v1738
    %2472 = vmatprep.subr.bf16.mxu0 0
    %2473 = vmatpush1.bf16.msra.mxu0 %v1739
    %2474 = vmatprep.subr.bf16.mxu0 0
    %2475 = vmatpush1.bf16.msra.mxu0 %v1740
    %2476 = vmatprep.subr.bf16.mxu0 0
    %2477 = vmatpush1.bf16.msra.mxu0 %v1741
    %2478 = vmatprep.subr.bf16.mxu0 0
    %2479 = vmatpush1.bf16.msra.mxu0 %v1742
    %2480 = vmatprep.subr.bf16.mxu0 0
    %2481 = vmatpush1.bf16.msra.mxu0 %v1743
    %2482 = vmatprep.subr.bf16.mxu0 0
    %2483 = vmatpush1.bf16.msra.mxu0 %v1744
    %2484 = vmatprep.subr.bf16.mxu0 0
    %2485 = vmatpush1.bf16.msra.mxu0 %v1745
    %2486 = vmatprep.subr.bf16.mxu0 0
    %2487 = vmatpush1.bf16.msra.mxu0 %v1746
    %2488 = vmatprep.subr.bf16.mxu0 0
    %2489 = vmatpush1.bf16.msra.mxu0 %v1747
    %2490 = vmatprep.subr.bf16.mxu0 0
    %2491 = vmatpush1.bf16.msra.mxu0 %v1748
    %2492 = vmatprep.subr.bf16.mxu0 0
    %2493 = vmatpush1.bf16.msra.mxu0 %v1749
    %2494 = vmatprep.mubr.bf16.mxu0 %v67
    %2495 = vmatmul.mubr.bf16.gmra.mrb[0].mxu0 %v66
    %v2496 = vpop.f32.mrb[0].mxu0
    %v2497 = vadd.f32 %v2457, %v2496
    %v2498 = vpop.f32.mrb[0].mxu0
    %v2499 = vpop.f32.mrb[0].mxu0
    %v2500 = vpop.f32.mrb[0].mxu0
    %2501 = vdwg.mxu0
    %2502 = vmatprep.subr.bf16.mxu0 0
    %2503 = vmatpush1.bf16.msra.mxu0 %v1750
    %2504 = vmatprep.subr.bf16.mxu0 0
    %2505 = vmatpush1.bf16.msra.mxu0 %v1751
    %2506 = vmatprep.subr.bf16.mxu0 0
    %2507 = vmatpush1.bf16.msra.mxu0 %v1752
    %2508 = vmatprep.subr.bf16.mxu0 0
    %2509 = vmatpush1.bf16.msra.mxu0 %v1753
    %2510 = vmatprep.subr.bf16.mxu0 0
    %2511 = vmatpush1.bf16.msra.mxu0 %v1754
    %2512 = vmatprep.subr.bf16.mxu0 0
    %2513 = vmatpush1.bf16.msra.mxu0 %v1755
    %2514 = vmatprep.subr.bf16.mxu0 0
    %2515 = vmatpush1.bf16.msra.mxu0 %v1756
    %2516 = vmatprep.subr.bf16.mxu0 0
    %2517 = vmatpush1.bf16.msra.mxu0 %v1757
    %2518 = vmatprep.subr.bf16.mxu0 0
    %2519 = vmatpush1.bf16.msra.mxu0 %v1758
    %2520 = vmatprep.subr.bf16.mxu0 0
    %2521 = vmatpush1.bf16.msra.mxu0 %v1759
    %2522 = vmatprep.subr.bf16.mxu0 0
    %2523 = vmatpush1.bf16.msra.mxu0 %v1760
    %2524 = vmatprep.subr.bf16.mxu0 0
    %2525 = vmatpush1.bf16.msra.mxu0 %v1761
    %2526 = vmatprep.subr.bf16.mxu0 0
    %2527 = vmatpush1.bf16.msra.mxu0 %v1762
    %2528 = vmatprep.subr.bf16.mxu0 0
    %2529 = vmatpush1.bf16.msra.mxu0 %v1763
    %2530 = vmatprep.subr.bf16.mxu0 0
    %2531 = vmatpush1.bf16.msra.mxu0 %v1764
    %2532 = vmatprep.subr.bf16.mxu0 0
    %2533 = vmatpush1.bf16.msra.mxu0 %v1765
    %2534 = vmatprep.mubr.bf16.mxu0 %v69
    %2535 = vmatmul.mubr.bf16.gmra.mrb[0].mxu0 %v68
    %v2536 = vpop.f32.mrb[0].mxu0
    %v2537 = vadd.f32 %v2497, %v2536
    %v2538 = vpop.f32.mrb[0].mxu0
    %v2539 = vpop.f32.mrb[0].mxu0
    %v2540 = vpop.f32.mrb[0].mxu0
    %2541 = vdwg.mxu0
    %2542 = vmatprep.subr.bf16.mxu0 0
    %2543 = vmatpush1.bf16.msra.mxu0 %v1766
    %2544 = vmatprep.subr.bf16.mxu0 0
    %2545 = vmatpush1.bf16.msra.mxu0 %v1767
    %2546 = vmatprep.subr.bf16.mxu0 0
    %2547 = vmatpush1.bf16.msra.mxu0 %v1768
    %2548 = vmatprep.subr.bf16.mxu0 0
    %2549 = vmatpush1.bf16.msra.mxu0 %v1769
    %2550 = vmatprep.subr.bf16.mxu0 0
    %2551 = vmatpush1.bf16.msra.mxu0 %v1770
    %2552 = vmatprep.subr.bf16.mxu0 0
    %2553 = vmatpush1.bf16.msra.mxu0 %v1771
    %2554 = vmatprep.subr.bf16.mxu0 0
    %2555 = vmatpush1.bf16.msra.mxu0 %v1772
    %2556 = vmatprep.subr.bf16.mxu0 0
    %2557 = vmatpush1.bf16.msra.mxu0 %v1773
    %2558 = vmatprep.subr.bf16.mxu0 0
    %2559 = vmatpush1.bf16.msra.mxu0 %v1774
    %2560 = vmatprep.subr.bf16.mxu0 0
    %2561 = vmatpush1.bf16.msra.mxu0 %v1775
    %2562 = vmatprep.subr.bf16.mxu0 0
    %2563 = vmatpush1.bf16.msra.mxu0 %v1776
    %2564 = vmatprep.subr.bf16.mxu0 0
    %2565 = vmatpush1.bf16.msra.mxu0 %v1777
    %2566 = vmatprep.subr.bf16.mxu0 0
    %2567 = vmatpush1.bf16.msra.mxu0 %v1778
    %2568 = vmatprep.subr.bf16.mxu0 0
    %2569 = vmatpush1.bf16.msra.mxu0 %v1779
    %2570 = vmatprep.subr.bf16.mxu0 0
    %2571 = vmatpush1.bf16.msra.mxu0 %v1780
    %2572 = vmatprep.subr.bf16.mxu0 0
    %2573 = vmatpush1.bf16.msra.mxu0 %v1781
    %2574 = vmatprep.mubr.bf16.mxu0 %v71
    %2575 = vmatmul.mubr.bf16.gmra.mrb[0].mxu0 %v70
    %v2576 = vpop.f32.mrb[0].mxu0
    %v2577 = vadd.f32 %v2537, %v2576
    %v2578 = vpop.f32.mrb[0].mxu0
    %v2579 = vpop.f32.mrb[0].mxu0
    %v2580 = vpop.f32.mrb[0].mxu0
    %2581 = vdwg.mxu0
    %2582 = vmatprep.subr.bf16.mxu0 0
    %2583 = vmatpush1.bf16.msra.mxu0 %v1782
    %2584 = vmatprep.subr.bf16.mxu0 0
    %2585 = vmatpush1.bf16.msra.mxu0 %v1783
    %2586 = vmatprep.subr.bf16.mxu0 0
    %2587 = vmatpush1.bf16.msra.mxu0 %v1784
    %2588 = vmatprep.subr.bf16.mxu0 0
    %2589 = vmatpush1.bf16.msra.mxu0 %v1785
    %2590 = vmatprep.subr.bf16.mxu0 0
    %2591 = vmatpush1.bf16.msra.mxu0 %v1786
    %2592 = vmatprep.subr.bf16.mxu0 0
    %2593 = vmatpush1.bf16.msra.mxu0 %v1787
    %2594 = vmatprep.subr.bf16.mxu0 0
    %2595 = vmatpush1.bf16.msra.mxu0 %v1788
    %2596 = vmatprep.subr.bf16.mxu0 0
    %2597 = vmatpush1.bf16.msra.mxu0 %v1789
    %2598 = vmatprep.subr.bf16.mxu0 0
    %2599 = vmatpush1.bf16.msra.mxu0 %v1790
    %2600 = vmatprep.subr.bf16.mxu0 0
    %2601 = vmatpush1.bf16.msra.mxu0 %v1791
    %2602 = vmatprep.subr.bf16.mxu0 0
    %2603 = vmatpush1.bf16.msra.mxu0 %v1792
    %2604 = vmatprep.subr.bf16.mxu0 0
    %2605 = vmatpush1.bf16.msra.mxu0 %v1793
    %2606 = vmatprep.subr.bf16.mxu0 0
    %2607 = vmatpush1.bf16.msra.mxu0 %v1794
    %2608 = vmatprep.subr.bf16.mxu0 0
    %2609 = vmatpush1.bf16.msra.mxu0 %v1795
    %2610 = vmatprep.subr.bf16.mxu0 0
    %2611 = vmatpush1.bf16.msra.mxu0 %v1796
    %2612 = vmatprep.subr.bf16.mxu0 0
    %2613 = vmatpush1.bf16.msra.mxu0 %v1797
    %2614 = vmatprep.mubr.bf16.mxu0 %v73
    %2615 = vmatmul.mubr.bf16.gmra.mrb[0].mxu0 %v72
    %v2616 = vpop.f32.mrb[0].mxu0
    %v2617 = vadd.f32 %v2577, %v2616
    %v2618 = vpop.f32.mrb[0].mxu0
    %v2619 = vpop.f32.mrb[0].mxu0
    %v2620 = vpop.f32.mrb[0].mxu0
    %2621 = vdwg.mxu0
    %2622 = vmatprep.subr.bf16.mxu0 0
    %2623 = vmatpush1.bf16.msra.mxu0 %v1798
    %2624 = vmatprep.subr.bf16.mxu0 0
    %2625 = vmatpush1.bf16.msra.mxu0 %v1799
    %2626 = vmatprep.subr.bf16.mxu0 0
    %2627 = vmatpush1.bf16.msra.mxu0 %v1800
    %2628 = vmatprep.subr.bf16.mxu0 0
    %2629 = vmatpush1.bf16.msra.mxu0 %v1801
    %2630 = vmatprep.subr.bf16.mxu0 0
    %2631 = vmatpush1.bf16.msra.mxu0 %v1802
    %2632 = vmatprep.subr.bf16.mxu0 0
    %2633 = vmatpush1.bf16.msra.mxu0 %v1803
    %2634 = vmatprep.subr.bf16.mxu0 0
    %2635 = vmatpush1.bf16.msra.mxu0 %v1804
    %2636 = vmatprep.subr.bf16.mxu0 0
    %2637 = vmatpush1.bf16.msra.mxu0 %v1805
    %2638 = vmatprep.subr.bf16.mxu0 0
    %2639 = vmatpush1.bf16.msra.mxu0 %v1806
    %2640 = vmatprep.subr.bf16.mxu0 0
    %2641 = vmatpush1.bf16.msra.mxu0 %v1807
    %2642 = vmatprep.subr.bf16.mxu0 0
    %2643 = vmatpush1.bf16.msra.mxu0 %v1808
    %2644 = vmatprep.subr.bf16.mxu0 0
    %2645 = vmatpush1.bf16.msra.mxu0 %v1809
    %2646 = vmatprep.subr.bf16.mxu0 0
    %2647 = vmatpush1.bf16.msra.mxu0 %v1810
    %2648 = vmatprep.subr.bf16.mxu0 0
    %2649 = vmatpush1.bf16.msra.mxu0 %v1811
    %2650 = vmatprep.subr.bf16.mxu0 0
    %2651 = vmatpush1.bf16.msra.mxu0 %v1812
    %2652 = vmatprep.subr.bf16.mxu0 0
    %2653 = vmatpush1.bf16.msra.mxu0 %v1813
    %2654 = vmatprep.mubr.bf16.mxu0 %v75
    %2655 = vmatmul.mubr.bf16.gmra.mrb[0].mxu0 %v74
    %v2656 = vpop.f32.mrb[0].mxu0
    %v2657 = vadd.f32 %v2617, %v2656
    %v2658 = vpop.f32.mrb[0].mxu0
    %v2659 = vpop.f32.mrb[0].mxu0
    %v2660 = vpop.f32.mrb[0].mxu0
    %2661 = vdwg.mxu0
    %2662 = vmatprep.subr.bf16.mxu0 0
    %2663 = vmatpush1.bf16.msra.mxu0 %v1814
    %2664 = vmatprep.subr.bf16.mxu0 0
    %2665 = vmatpush1.bf16.msra.mxu0 %v1815
    %2666 = vmatprep.subr.bf16.mxu0 0
    %2667 = vmatpush1.bf16.msra.mxu0 %v1816
    %2668 = vmatprep.subr.bf16.mxu0 0
    %2669 = vmatpush1.bf16.msra.mxu0 %v1817
    %2670 = vmatprep.subr.bf16.mxu0 0
    %2671 = vmatpush1.bf16.msra.mxu0 %v1818
    %2672 = vmatprep.subr.bf16.mxu0 0
    %2673 = vmatpush1.bf16.msra.mxu0 %v1819
    %2674 = vmatprep.subr.bf16.mxu0 0
    %2675 = vmatpush1.bf16.msra.mxu0 %v1820
    %2676 = vmatprep.subr.bf16.mxu0 0
    %2677 = vmatpush1.bf16.msra.mxu0 %v1821
    %2678 = vmatprep.subr.bf16.mxu0 0
    %2679 = vmatpush1.bf16.msra.mxu0 %v1822
    %2680 = vmatprep.subr.bf16.mxu0 0
    %2681 = vmatpush1.bf16.msra.mxu0 %v1823
    %2682 = vmatprep.subr.bf16.mxu0 0
    %2683 = vmatpush1.bf16.msra.mxu0 %v1824
    %2684 = vmatprep.subr.bf16.mxu0 0
    %2685 = vmatpush1.bf16.msra.mxu0 %v1825
    %2686 = vmatprep.subr.bf16.mxu0 0
    %2687 = vmatpush1.bf16.msra.mxu0 %v1826
    %2688 = vmatprep.subr.bf16.mxu0 0
    %2689 = vmatpush1.bf16.msra.mxu0 %v1827
    %2690 = vmatprep.subr.bf16.mxu0 0
    %2691 = vmatpush1.bf16.msra.mxu0 %v1828
    %2692 = vmatprep.subr.bf16.mxu0 0
    %2693 = vmatpush1.bf16.msra.mxu0 %v1829
    %2694 = vmatprep.mubr.bf16.mxu0 %v77
    %2695 = vmatmul.mubr.bf16.gmra.mrb[0].mxu0 %v76
    %v2696 = vpop.f32.mrb[0].mxu0
    %v2697 = vadd.f32 %v2657, %v2696
    %v2698 = vpop.f32.mrb[0].mxu0
    %v2699 = vpop.f32.mrb[0].mxu0
    %v2700 = vpop.f32.mrb[0].mxu0
    %2701 = vdwg.mxu0
    %2702 = vmatprep.subr.bf16.mxu0 0
    %2703 = vmatpush1.bf16.msra.mxu0 %v1830
    %2704 = vmatprep.subr.bf16.mxu0 0
    %2705 = vmatpush1.bf16.msra.mxu0 %v1831
    %2706 = vmatprep.subr.bf16.mxu0 0
    %2707 = vmatpush1.bf16.msra.mxu0 %v1832
    %2708 = vmatprep.subr.bf16.mxu0 0
    %2709 = vmatpush1.bf16.msra.mxu0 %v1833
    %2710 = vmatprep.subr.bf16.mxu0 0
    %2711 = vmatpush1.bf16.msra.mxu0 %v1834
    %2712 = vmatprep.subr.bf16.mxu0 0
    %2713 = vmatpush1.bf16.msra.mxu0 %v1835
    %2714 = vmatprep.subr.bf16.mxu0 0
    %2715 = vmatpush1.bf16.msra.mxu0 %v1836
    %2716 = vmatprep.subr.bf16.mxu0 0
    %2717 = vmatpush1.bf16.msra.mxu0 %v1837
    %2718 = vmatprep.subr.bf16.mxu0 0
    %2719 = vmatpush1.bf16.msra.mxu0 %v1838
    %2720 = vmatprep.subr.bf16.mxu0 0
    %2721 = vmatpush1.bf16.msra.mxu0 %v1839
    %2722 = vmatprep.subr.bf16.mxu0 0
    %2723 = vmatpush1.bf16.msra.mxu0 %v2100
    %2724 = vmatprep.subr.bf16.mxu0 0
    %2725 = vmatpush1.bf16.msra.mxu0 0
    %2726 = vmatprep.subr.bf16.mxu0 0
    %2727 = vmatpush1.bf16.msra.mxu0 0
    %2728 = vmatprep.subr.bf16.mxu0 0
    %2729 = vmatpush1.bf16.msra.mxu0 0
    %2730 = vmatprep.subr.bf16.mxu0 0
    %2731 = vmatpush1.bf16.msra.mxu0 0
    %2732 = vmatprep.subr.bf16.mxu0 0
    %2733 = vmatpush1.bf16.msra.mxu0 0
    %2734 = vmatprep.mubr.bf16.mxu0 %v2093
    %2735 = vmatmul.mubr.bf16.gmra.mrb[0].mxu0 %v78
    %v2736 = vpop.f32.mrb[0].mxu0
    %v2737 = vadd.f32 %v2697, %v2736
    %v2738 = vpop.f32.mrb[0].mxu0
    %v2739 = vpop.f32.mrb[0].mxu0
    %v2740 = vpop.f32.mrb[0].mxu0
    %2741 = vdwg.mxu0
    %vm2742 = vcmask 523264
    %2743 = vst.msk [vmem:[#allocation2] sm:$0xff] %vm2742, %v2737
    // Predicated region
    $region14: #{resnet2_forward.1} parent=1 // pred_check
      _
    $region15: #{resnet2_forward.1} parent=1 // pred_check_branch
      %2745 = sbr.rel (0) target = $region17
    $region16: #{resnet2_forward.1} parent=1 // pred_region
      %s2747 = ssub.s32 128, 128
      %2748 = vsyncadd [#allocation3], %s2747
      %s2750 = sshll.u32 [#allocation2], 4
      %s2751 = int_to_ptr.vmem [resolvable:$true] %s2750
      %2753 = dma.vmem_to_hbm [thread:$0]  %s2751, 128, %s3, [#allocation3]
    $region17: #{resnet2_forward.1} parent=1 // pred_fallthru
      _
    // Predicated region
    $region18: #{resnet2_forward.1} parent=1 // pred_check
      _
    $region19: #{resnet2_forward.1} parent=1 // pred_check_branch
      %2755 = sbr.rel (0) target = $region21
    $region20: #{resnet2_forward.1} parent=1 // pred_region
      %2756 = dma.done [#allocation3], 128
    $region21: #{resnet2_forward.1} parent=1 // pred_fallthru
      _
    %2757 = vsyncpa [#allocation3], 1

</llo_original>
